<compile_context>
chip_gen: v5e
topology: v5e:2x2
jax: 0.10.0
libtpu: 0.0.40
codegen_flags: <defaults>
</compile_context>

<pallas_src>
import functools

import jax
import jax.numpy as jnp
from jax import lax
from jax.experimental import pallas as pl
from jax.experimental.pallas import tpu as pltpu


def _lstm_stack_kernel(*refs, num_layers, hidden_size, t_steps, b_pad):
    """Fused multi-layer LSTM.

    refs layout (all full-array VMEM blocks, grid=()):
      inputs : gx0 (T*Bp, 4H)  -- hoisted layer-0 input projection x@W_ih0 + b0
               h0  (L, Bp, H)
               c0  (L, Bp, H)
               w_hh_0 (H, 4H)
               then, for each layer l >= 1: w_ih_l (H, 4H), w_hh_l (H, 4H), b_l (1, 4H)
      outputs: out (T*Bp, H)   -- last layer's hidden sequence (row = t*Bp + b)
               h_n (L, Bp, H)
               c_n (L, Bp, H)
      scratch: gates (T*Bp, 4H) -- hoisted input projection for layers >= 1
    """
    L, H, T, Bp = num_layers, hidden_size, t_steps, b_pad
    n_in = 4 + 3 * (L - 1)
    gx0_ref, h0_ref, c0_ref, w_hh0_ref = refs[0:4]
    layer_refs = refs[4:n_in]
    out_ref, hn_ref, cn_ref = refs[n_in:n_in + 3]
    gates_scr = refs[n_in + 3]

    def run_layer(gate_ref, w_hh_ref, h_init, c_init):
        """Sequential recurrence; only h @ W_hh remains on the serial critical path."""
        w_hh = w_hh_ref[...]  # hoist weight load out of the loop

        def step(t, carry):
            h, c = carry
            row = pl.multiple_of(t * Bp, Bp)         # aligned sublane offset
            gates = (gate_ref[pl.ds(row, Bp), :]
                     + jnp.dot(h, w_hh, preferred_element_type=jnp.float32))
            # NOTE: with H=32 all four gates share one 128-lane vreg; sub-lane
            # slices are cheap XLU extracts at this size.  For production H,
            # pad H to a multiple of 128 so each gate is its own lane tile.
            i_g = jax.nn.sigmoid(gates[:, 0 * H:1 * H])
            f_g = jax.nn.sigmoid(gates[:, 1 * H:2 * H])
            g_g = jnp.tanh(gates[:, 2 * H:3 * H])
            o_g = jax.nn.sigmoid(gates[:, 3 * H:4 * H])
            c_new = f_g * c + i_g * g_g
            h_new = o_g * jnp.tanh(c_new)
            out_ref[pl.ds(row, Bp), :] = h_new
            return h_new, c_new

        # Fully unroll the short time loop for LLO scheduler visibility
        # (for long sequences prefer a partial unroll factor).
        return lax.fori_loop(0, T, step, (h_init, c_init), unroll=True)

    # ---- layer 0: input projection already hoisted outside the kernel ----
    hT, cT = run_layer(gx0_ref, w_hh0_ref, h0_ref[0], c0_ref[0])
    hn_ref[0] = hT
    cn_ref[0] = cT

    # ---- layers >= 1: hoist the input projection over the full previous-layer sequence
    #      (ONE big (T*Bp, H) @ (H, 4H) MXU GEMM per layer), then run the recurrence ----
    for l in range(1, L):
        w_ih_ref, w_hh_ref, b_ref = layer_refs[3 * (l - 1):3 * (l - 1) + 3]
        gates_scr[...] = (jnp.dot(out_ref[...], w_ih_ref[...],
                                  preferred_element_type=jnp.float32)
                          + b_ref[...])
        hT, cT = run_layer(gates_scr, w_hh_ref, h0_ref[l], c0_ref[l])
        hn_ref[l] = hT
        cn_ref[l] = cT


def lstm_stack_pallas(gx0_2d, h0, c0, w_hh0, layer_rest, *, num_layers, hidden_size,
                      t_steps, b_pad):
    """gx0_2d: (T*Bp, 4H); h0/c0: (L, Bp, H); returns (out (T*Bp, H), h_n, c_n)."""
    H, T, Bp, L = hidden_size, t_steps, b_pad, num_layers
    kernel = functools.partial(_lstm_stack_kernel, num_layers=L, hidden_size=H,
                               t_steps=T, b_pad=Bp)
    # Single invocation (grid=()): everything stays resident in VMEM for the whole
    # stack -> no per-time-step grid overhead, no per-layer HBM round trips.
    # For production batch sizes on v7x, add a leading "parallel" grid axis over
    # batch chunks to use the second TensorCore (time must stay sequential).
    return pl.pallas_call(
        kernel,
        out_shape=(
            jax.ShapeDtypeStruct((T * Bp, H), jnp.float32),   # last-layer sequence
            jax.ShapeDtypeStruct((L, Bp, H), jnp.float32),    # h_n
            jax.ShapeDtypeStruct((L, Bp, H), jnp.float32),    # c_n
        ),
        scratch_shapes=[pltpu.VMEM((T * Bp, 4 * H), jnp.float32)],
    )(gx0_2d, h0, c0, w_hh0, *layer_rest)


class MyLSTM2Pallas:
    """Pallas implementation of MyLSTM2: multi-layer batch_first LSTM + Linear(H, 3)."""

    def __init__(self, input_size, hidden_size, num_layers, key):
        self.input_size = input_size
        self.hidden_size = hidden_size
        self.num_layers = num_layers

        H = hidden_size
        k = 1.0 / jnp.sqrt(jnp.float32(H))
        keys = jax.random.split(key, 4 * num_layers + 2)

        # Kept in f32 for exact small-shape verification; for production H use bf16
        # weights (halves VMEM/DMA; fits v7x's 64 MiB budget) with f32 accumulation.
        self.layer_params = []
        for l in range(num_layers):
            in_sz = input_size if l == 0 else hidden_size
            kw_ih, kw_hh, kb_ih, kb_hh = keys[4 * l:4 * l + 4]
            w_ih = jax.random.uniform(kw_ih, (in_sz, 4 * H), jnp.float32, -k, k)
            w_hh = jax.random.uniform(kw_hh, (H, 4 * H), jnp.float32, -k, k)
            b_ih = jax.random.uniform(kb_ih, (4 * H,), jnp.float32, -k, k)
            b_hh = jax.random.uniform(kb_hh, (4 * H,), jnp.float32, -k, k)
            self.layer_params.append((w_ih, w_hh, b_ih + b_hh))

        kf = 1.0 / jnp.sqrt(jnp.float32(H))
        self.fc_w = jax.random.uniform(keys[-2], (H, 3), jnp.float32, -kf, kf)
        self.fc_b = jax.random.uniform(keys[-1], (3,), jnp.float32, -kf, kf)

    def __call__(self, x, h1, c1):
        # x: (B, T, input_size) batch_first; h1, c1: (num_layers, B, H)
        B, T, _ = x.shape
        H, L = self.hidden_size, self.num_layers
        hp = jax.lax.Precision.HIGHEST

        Bp = ((B + 7) // 8) * 8          # pad batch to 8-sublane granularity
        pad_b = Bp - B

        w_ih0, _, b0 = self.layer_params[0]
        w_hh0 = self.layer_params[0][1]

        # Hoisted layer-0 input projection: ONE big GEMM over all (t, b) rows, with the
        # batch-first -> time-major layout change folded into the contraction
        # (no explicit full-tensor transpose op).
        gx0 = jnp.einsum('bti,ig->tbg', x, w_ih0, precision=hp) + b0      # (T, B, 4H)
        gx0 = jnp.pad(gx0, ((0, 0), (0, pad_b), (0, 0)))
        gx0_2d = gx0.reshape(T * Bp, 4 * H)

        h0p = jnp.pad(h1, ((0, 0), (0, pad_b), (0, 0)))
        c0p = jnp.pad(c1, ((0, 0), (0, pad_b), (0, 0)))

        layer_rest = []
        for l in range(1, L):
            w_ih, w_hh, b = self.layer_params[l]
            layer_rest += [w_ih, w_hh, b.reshape(1, 4 * H)]

        out2d, hn_p, cn_p = lstm_stack_pallas(
            gx0_2d, h0p, c0p, w_hh0, layer_rest,
            num_layers=L, hidden_size=H, t_steps=T, b_pad=Bp)

        out_tm = out2d.reshape(T, Bp, H)[:, :B, :]                         # (T, B, H)

        # FC epilogue in plain XLA: output lane width is 3, a standalone pallas_call
        # would be pure launch/masked-store overhead.  Time-major -> batch-first is
        # folded into the einsum.
        out = jnp.einsum('tbh,ho->bto', out_tm, self.fc_w, precision=hp) + self.fc_b

        h_n = hn_p[:, :B, :]
        c_n = cn_p[:, :B, :]
        return out, (h_n, c_n)


# ----------------------- pure-JAX reference for verification -----------------------
def _ref_forward(model, x, h1, c1):
    B, T, _ = x.shape
    H = model.hidden_size
    hp = jax.lax.Precision.HIGHEST
    layer_in = x
    h_finals, c_finals = [], []
    for l, (w_ih, w_hh, b) in enumerate(model.layer_params):
        h, c = h1[l], c1[l]
        outs = []
        for t in range(T):
            g = (jnp.dot(layer_in[:, t], w_ih, precision=hp)
                 + jnp.dot(h, w_hh, precision=hp) + b)
            i_g = jax.nn.sigmoid(g[:, 0 * H:1 * H])
            f_g = jax.nn.sigmoid(g[:, 1 * H:2 * H])
            g_g = jnp.tanh(g[:, 2 * H:3 * H])
            o_g = jax.nn.sigmoid(g[:, 3 * H:4 * H])
            c = f_g * c + i_g * g_g
            h = o_g * jnp.tanh(c)
            outs.append(h)
        layer_in = jnp.stack(outs, axis=1)
        h_finals.append(h)
        c_finals.append(c)
    out = jnp.dot(layer_in.reshape(-1, H), model.fc_w, precision=hp) + model.fc_b
    return (out.reshape(B, T, -1),
            (jnp.stack(h_finals, 0), jnp.stack(c_finals, 0)))


if __name__ == "__main__":
    batch, seq_len = 2, 8
    input_size, hidden_size, num_layers = 16, 32, 2

    key = jax.random.PRNGKey(0)
    k_model, k_x, k_h, k_c = jax.random.split(key, 4)

    model = MyLSTM2Pallas(input_size, hidden_size, num_layers, k_model)

    x = jax.random.normal(k_x, (batch, seq_len, input_size), jnp.float32)
    h1 = jax.random.normal(k_h, (num_layers, batch, hidden_size), jnp.float32)
    c1 = jax.random.normal(k_c, (num_layers, batch, hidden_size), jnp.float32)

    out, (h_n, c_n) = model(x, h1, c1)
    jax.block_until_ready((out, h_n, c_n))

    ref_out, (ref_h, ref_c) = _ref_forward(model, x, h1, c1)
    assert out.shape == (batch, seq_len, 3)
    assert h_n.shape == (num_layers, batch, hidden_size)
    assert c_n.shape == (num_layers, batch, hidden_size)
    assert jnp.allclose(out, ref_out, atol=1e-4, rtol=1e-4)
    assert jnp.allclose(h_n, ref_h, atol=1e-4, rtol=1e-4)
    assert jnp.allclose(c_n, ref_c, atol=1e-4, rtol=1e-4)

    print("KERNEL_OK")
</pallas_src>

<mosaic_0001>
module attributes {stable_mosaic.version = 11 : i64} {
  func.func @_lstm_stack_kernel(%arg0: memref<64x128xf32, #tpu.memory_space<vmem>>, %arg1: memref<2x8x32xf32, #tpu.memory_space<vmem>>, %arg2: memref<2x8x32xf32, #tpu.memory_space<vmem>>, %arg3: memref<32x128xf32, #tpu.memory_space<vmem>>, %arg4: memref<32x128xf32, #tpu.memory_space<vmem>>, %arg5: memref<32x128xf32, #tpu.memory_space<vmem>>, %arg6: memref<1x128xf32, #tpu.memory_space<vmem>>, %arg7: memref<64x32xf32, #tpu.memory_space<vmem>>, %arg8: memref<2x8x32xf32, #tpu.memory_space<vmem>>, %arg9: memref<2x8x32xf32, #tpu.memory_space<vmem>>, %arg10: memref<64x128xf32, #tpu.memory_space<vmem>>) attributes {dimension_semantics = [], scalar_prefetch = 0 : i64, scratch_operands = 1 : i64, tpu.core_type = #tpu.core_type<tc>} {
    %c0 = arith.constant 0 : index
    %c0_0 = arith.constant 0 : index
    %c0_1 = arith.constant 0 : index
    %0 = vector.load %arg1[%c0, %c0_0, %c0_1] : memref<2x8x32xf32, #tpu.memory_space<vmem>>, vector<1x8x32xf32>
    %1 = vector.shape_cast %0 : vector<1x8x32xf32> to vector<8x32xf32>
    %c0_2 = arith.constant 0 : index
    %c0_3 = arith.constant 0 : index
    %c0_4 = arith.constant 0 : index
    %2 = vector.load %arg2[%c0_2, %c0_3, %c0_4] : memref<2x8x32xf32, #tpu.memory_space<vmem>>, vector<1x8x32xf32>
    %3 = vector.shape_cast %2 : vector<1x8x32xf32> to vector<8x32xf32>
    %c0_5 = arith.constant 0 : index
    %c0_6 = arith.constant 0 : index
    %4 = vector.load %arg3[%c0_5, %c0_6] : memref<32x128xf32, #tpu.memory_space<vmem>>, vector<32x128xf32>
    %c0_i32 = arith.constant 0 : i32
    %c8_i32 = arith.constant 8 : i32
    %5 = arith.muli %c0_i32, %c8_i32 : i32
    %6 = tpu.assume_multiple %5, 8 : i32
    %7 = arith.index_cast %6 : i32 to index
    %c0_7 = arith.constant 0 : index
    %8 = vector.load %arg0[%7, %c0_7] : memref<64x128xf32, #tpu.memory_space<vmem>>, vector<8x128xf32>
    %cst = arith.constant dense<0.000000e+00> : vector<8x128xf32>
    %9 = tpu.matmul %1, %4, %cst {dimension_numbers = #tpu.dot_dimension_numbers<[1], [0], [0], [1], [0, 0, 1, 1], [], []>} : vector<8x32xf32>, vector<32x128xf32>, vector<8x128xf32> -> vector<8x128xf32>
    %10 = arith.addf %8, %9 : vector<8x128xf32>
    %11 = vector.extract_strided_slice %10 {offsets = [0, 0], sizes = [8, 32], strides = [1, 1]} : vector<8x128xf32> to vector<8x32xf32>
    %12 = arith.negf %11 : vector<8x32xf32>
    %13 = math.exp %12 : vector<8x32xf32>
    %cst_8 = arith.constant 1.000000e+00 : f32
    %14 = vector.broadcast %cst_8 : f32 to vector<8x32xf32>
    %15 = arith.addf %14, %13 : vector<8x32xf32>
    %16 = arith.divf %14, %15 : vector<8x32xf32>
    %17 = vector.extract_strided_slice %10 {offsets = [0, 32], sizes = [8, 32], strides = [1, 1]} : vector<8x128xf32> to vector<8x32xf32>
    %18 = arith.negf %17 : vector<8x32xf32>
    %19 = math.exp %18 : vector<8x32xf32>
    %cst_9 = arith.constant 1.000000e+00 : f32
    %20 = vector.broadcast %cst_9 : f32 to vector<8x32xf32>
    %21 = arith.addf %20, %19 : vector<8x32xf32>
    %22 = arith.divf %20, %21 : vector<8x32xf32>
    %23 = vector.extract_strided_slice %10 {offsets = [0, 64], sizes = [8, 32], strides = [1, 1]} : vector<8x128xf32> to vector<8x32xf32>
    %24 = math.tanh %23 : vector<8x32xf32>
    %25 = vector.extract_strided_slice %10 {offsets = [0, 96], sizes = [8, 32], strides = [1, 1]} : vector<8x128xf32> to vector<8x32xf32>
    %26 = arith.negf %25 : vector<8x32xf32>
    %27 = math.exp %26 : vector<8x32xf32>
    %cst_10 = arith.constant 1.000000e+00 : f32
    %28 = vector.broadcast %cst_10 : f32 to vector<8x32xf32>
    %29 = arith.addf %28, %27 : vector<8x32xf32>
    %30 = arith.divf %28, %29 : vector<8x32xf32>
    %31 = arith.mulf %22, %3 : vector<8x32xf32>
    %32 = arith.mulf %16, %24 : vector<8x32xf32>
    %33 = arith.addf %31, %32 : vector<8x32xf32>
    %34 = math.tanh %33 : vector<8x32xf32>
    %35 = arith.mulf %30, %34 : vector<8x32xf32>
    %36 = arith.index_cast %6 : i32 to index
    %c0_11 = arith.constant 0 : index
    %37 = vector.load %arg7[%36, %c0_11] : memref<64x32xf32, #tpu.memory_space<vmem>>, vector<8x32xf32>
    tpu.vector_store %arg7[%36, %c0_11], %35 {strides = array<i32>} : memref<64x32xf32, #tpu.memory_space<vmem>>, vector<8x32xf32>,
    %c1_i32 = arith.constant 1 : i32
    %c8_i32_12 = arith.constant 8 : i32
    %38 = arith.muli %c1_i32, %c8_i32_12 : i32
    %39 = tpu.assume_multiple %38, 8 : i32
    %40 = arith.index_cast %39 : i32 to index
    %c0_13 = arith.constant 0 : index
    %41 = vector.load %arg0[%40, %c0_13] : memref<64x128xf32, #tpu.memory_space<vmem>>, vector<8x128xf32>
    %cst_14 = arith.constant dense<0.000000e+00> : vector<8x128xf32>
    %42 = tpu.matmul %35, %4, %cst_14 {dimension_numbers = #tpu.dot_dimension_numbers<[1], [0], [0], [1], [0, 0, 1, 1], [], []>} : vector<8x32xf32>, vector<32x128xf32>, vector<8x128xf32> -> vector<8x128xf32>
    %43 = arith.addf %41, %42 : vector<8x128xf32>
    %44 = vector.extract_strided_slice %43 {offsets = [0, 0], sizes = [8, 32], strides = [1, 1]} : vector<8x128xf32> to vector<8x32xf32>
    %45 = arith.negf %44 : vector<8x32xf32>
    %46 = math.exp %45 : vector<8x32xf32>
    %cst_15 = arith.constant 1.000000e+00 : f32
    %47 = vector.broadcast %cst_15 : f32 to vector<8x32xf32>
    %48 = arith.addf %47, %46 : vector<8x32xf32>
    %49 = arith.divf %47, %48 : vector<8x32xf32>
    %50 = vector.extract_strided_slice %43 {offsets = [0, 32], sizes = [8, 32], strides = [1, 1]} : vector<8x128xf32> to vector<8x32xf32>
    %51 = arith.negf %50 : vector<8x32xf32>
    %52 = math.exp %51 : vector<8x32xf32>
    %cst_16 = arith.constant 1.000000e+00 : f32
    %53 = vector.broadcast %cst_16 : f32 to vector<8x32xf32>
    %54 = arith.addf %53, %52 : vector<8x32xf32>
    %55 = arith.divf %53, %54 : vector<8x32xf32>
    %56 = vector.extract_strided_slice %43 {offsets = [0, 64], sizes = [8, 32], strides = [1, 1]} : vector<8x128xf32> to vector<8x32xf32>
    %57 = math.tanh %56 : vector<8x32xf32>
    %58 = vector.extract_strided_slice %43 {offsets = [0, 96], sizes = [8, 32], strides = [1, 1]} : vector<8x128xf32> to vector<8x32xf32>
    %59 = arith.negf %58 : vector<8x32xf32>
    %60 = math.exp %59 : vector<8x32xf32>
    %cst_17 = arith.constant 1.000000e+00 : f32
    %61 = vector.broadcast %cst_17 : f32 to vector<8x32xf32>
    %62 = arith.addf %61, %60 : vector<8x32xf32>
    %63 = arith.divf %61, %62 : vector<8x32xf32>
    %64 = arith.mulf %55, %33 : vector<8x32xf32>
    %65 = arith.mulf %49, %57 : vector<8x32xf32>
    %66 = arith.addf %64, %65 : vector<8x32xf32>
    %67 = math.tanh %66 : vector<8x32xf32>
    %68 = arith.mulf %63, %67 : vector<8x32xf32>
    %69 = arith.index_cast %39 : i32 to index
    %c0_18 = arith.constant 0 : index
    %70 = vector.load %arg7[%69, %c0_18] : memref<64x32xf32, #tpu.memory_space<vmem>>, vector<8x32xf32>
    tpu.vector_store %arg7[%69, %c0_18], %68 {strides = array<i32>} : memref<64x32xf32, #tpu.memory_space<vmem>>, vector<8x32xf32>,
    %c2_i32 = arith.constant 2 : i32
    %c8_i32_19 = arith.constant 8 : i32
    %71 = arith.muli %c2_i32, %c8_i32_19 : i32
    %72 = tpu.assume_multiple %71, 8 : i32
    %73 = arith.index_cast %72 : i32 to index
    %c0_20 = arith.constant 0 : index
    %74 = vector.load %arg0[%73, %c0_20] : memref<64x128xf32, #tpu.memory_space<vmem>>, vector<8x128xf32>
    %cst_21 = arith.constant dense<0.000000e+00> : vector<8x128xf32>
    %75 = tpu.matmul %68, %4, %cst_21 {dimension_numbers = #tpu.dot_dimension_numbers<[1], [0], [0], [1], [0, 0, 1, 1], [], []>} : vector<8x32xf32>, vector<32x128xf32>, vector<8x128xf32> -> vector<8x128xf32>
    %76 = arith.addf %74, %75 : vector<8x128xf32>
    %77 = vector.extract_strided_slice %76 {offsets = [0, 0], sizes = [8, 32], strides = [1, 1]} : vector<8x128xf32> to vector<8x32xf32>
    %78 = arith.negf %77 : vector<8x32xf32>
    %79 = math.exp %78 : vector<8x32xf32>
    %cst_22 = arith.constant 1.000000e+00 : f32
    %80 = vector.broadcast %cst_22 : f32 to vector<8x32xf32>
    %81 = arith.addf %80, %79 : vector<8x32xf32>
    %82 = arith.divf %80, %81 : vector<8x32xf32>
    %83 = vector.extract_strided_slice %76 {offsets = [0, 32], sizes = [8, 32], strides = [1, 1]} : vector<8x128xf32> to vector<8x32xf32>
    %84 = arith.negf %83 : vector<8x32xf32>
    %85 = math.exp %84 : vector<8x32xf32>
    %cst_23 = arith.constant 1.000000e+00 : f32
    %86 = vector.broadcast %cst_23 : f32 to vector<8x32xf32>
    %87 = arith.addf %86, %85 : vector<8x32xf32>
    %88 = arith.divf %86, %87 : vector<8x32xf32>
    %89 = vector.extract_strided_slice %76 {offsets = [0, 64], sizes = [8, 32], strides = [1, 1]} : vector<8x128xf32> to vector<8x32xf32>
    %90 = math.tanh %89 : vector<8x32xf32>
    %91 = vector.extract_strided_slice %76 {offsets = [0, 96], sizes = [8, 32], strides = [1, 1]} : vector<8x128xf32> to vector<8x32xf32>
    %92 = arith.negf %91 : vector<8x32xf32>
    %93 = math.exp %92 : vector<8x32xf32>
    %cst_24 = arith.constant 1.000000e+00 : f32
    %94 = vector.broadcast %cst_24 : f32 to vector<8x32xf32>
    %95 = arith.addf %94, %93 : vector<8x32xf32>
    %96 = arith.divf %94, %95 : vector<8x32xf32>
    %97 = arith.mulf %88, %66 : vector<8x32xf32>
    %98 = arith.mulf %82, %90 : vector<8x32xf32>
    %99 = arith.addf %97, %98 : vector<8x32xf32>
    %100 = math.tanh %99 : vector<8x32xf32>
    %101 = arith.mulf %96, %100 : vector<8x32xf32>
    %102 = arith.index_cast %72 : i32 to index
    %c0_25 = arith.constant 0 : index
    %103 = vector.load %arg7[%102, %c0_25] : memref<64x32xf32, #tpu.memory_space<vmem>>, vector<8x32xf32>
    tpu.vector_store %arg7[%102, %c0_25], %101 {strides = array<i32>} : memref<64x32xf32, #tpu.memory_space<vmem>>, vector<8x32xf32>,
    %c3_i32 = arith.constant 3 : i32
    %c8_i32_26 = arith.constant 8 : i32
    %104 = arith.muli %c3_i32, %c8_i32_26 : i32
    %105 = tpu.assume_multiple %104, 8 : i32
    %106 = arith.index_cast %105 : i32 to index
    %c0_27 = arith.constant 0 : index
    %107 = vector.load %arg0[%106, %c0_27] : memref<64x128xf32, #tpu.memory_space<vmem>>, vector<8x128xf32>
    %cst_28 = arith.constant dense<0.000000e+00> : vector<8x128xf32>
    %108 = tpu.matmul %101, %4, %cst_28 {dimension_numbers = #tpu.dot_dimension_numbers<[1], [0], [0], [1], [0, 0, 1, 1], [], []>} : vector<8x32xf32>, vector<32x128xf32>, vector<8x128xf32> -> vector<8x128xf32>
    %109 = arith.addf %107, %108 : vector<8x128xf32>
    %110 = vector.extract_strided_slice %109 {offsets = [0, 0], sizes = [8, 32], strides = [1, 1]} : vector<8x128xf32> to vector<8x32xf32>
    %111 = arith.negf %110 : vector<8x32xf32>
    %112 = math.exp %111 : vector<8x32xf32>
    %cst_29 = arith.constant 1.000000e+00 : f32
    %113 = vector.broadcast %cst_29 : f32 to vector<8x32xf32>
    %114 = arith.addf %113, %112 : vector<8x32xf32>
    %115 = arith.divf %113, %114 : vector<8x32xf32>
    %116 = vector.extract_strided_slice %109 {offsets = [0, 32], sizes = [8, 32], strides = [1, 1]} : vector<8x128xf32> to vector<8x32xf32>
    %117 = arith.negf %116 : vector<8x32xf32>
    %118 = math.exp %117 : vector<8x32xf32>
    %cst_30 = arith.constant 1.000000e+00 : f32
    %119 = vector.broadcast %cst_30 : f32 to vector<8x32xf32>
    %120 = arith.addf %119, %118 : vector<8x32xf32>
    %121 = arith.divf %119, %120 : vector<8x32xf32>
    %122 = vector.extract_strided_slice %109 {offsets = [0, 64], sizes = [8, 32], strides = [1, 1]} : vector<8x128xf32> to vector<8x32xf32>
    %123 = math.tanh %122 : vector<8x32xf32>
    %124 = vector.extract_strided_slice %109 {offsets = [0, 96], sizes = [8, 32], strides = [1, 1]} : vector<8x128xf32> to vector<8x32xf32>
    %125 = arith.negf %124 : vector<8x32xf32>
    %126 = math.exp %125 : vector<8x32xf32>
    %cst_31 = arith.constant 1.000000e+00 : f32
    %127 = vector.broadcast %cst_31 : f32 to vector<8x32xf32>
    %128 = arith.addf %127, %126 : vector<8x32xf32>
    %129 = arith.divf %127, %128 : vector<8x32xf32>
    %130 = arith.mulf %121, %99 : vector<8x32xf32>
    %131 = arith.mulf %115, %123 : vector<8x32xf32>
    %132 = arith.addf %130, %131 : vector<8x32xf32>
    %133 = math.tanh %132 : vector<8x32xf32>
    %134 = arith.mulf %129, %133 : vector<8x32xf32>
    %135 = arith.index_cast %105 : i32 to index
    %c0_32 = arith.constant 0 : index
    %136 = vector.load %arg7[%135, %c0_32] : memref<64x32xf32, #tpu.memory_space<vmem>>, vector<8x32xf32>
    tpu.vector_store %arg7[%135, %c0_32], %134 {strides = array<i32>} : memref<64x32xf32, #tpu.memory_space<vmem>>, vector<8x32xf32>,
    %c4_i32 = arith.constant 4 : i32
    %c8_i32_33 = arith.constant 8 : i32
    %137 = arith.muli %c4_i32, %c8_i32_33 : i32
    %138 = tpu.assume_multiple %137, 8 : i32
    %139 = arith.index_cast %138 : i32 to index
    %c0_34 = arith.constant 0 : index
    %140 = vector.load %arg0[%139, %c0_34] : memref<64x128xf32, #tpu.memory_space<vmem>>, vector<8x128xf32>
    %cst_35 = arith.constant dense<0.000000e+00> : vector<8x128xf32>
    %141 = tpu.matmul %134, %4, %cst_35 {dimension_numbers = #tpu.dot_dimension_numbers<[1], [0], [0], [1], [0, 0, 1, 1], [], []>} : vector<8x32xf32>, vector<32x128xf32>, vector<8x128xf32> -> vector<8x128xf32>
    %142 = arith.addf %140, %141 : vector<8x128xf32>
    %143 = vector.extract_strided_slice %142 {offsets = [0, 0], sizes = [8, 32], strides = [1, 1]} : vector<8x128xf32> to vector<8x32xf32>
    %144 = arith.negf %143 : vector<8x32xf32>
    %145 = math.exp %144 : vector<8x32xf32>
    %cst_36 = arith.constant 1.000000e+00 : f32
    %146 = vector.broadcast %cst_36 : f32 to vector<8x32xf32>
    %147 = arith.addf %146, %145 : vector<8x32xf32>
    %148 = arith.divf %146, %147 : vector<8x32xf32>
    %149 = vector.extract_strided_slice %142 {offsets = [0, 32], sizes = [8, 32], strides = [1, 1]} : vector<8x128xf32> to vector<8x32xf32>
    %150 = arith.negf %149 : vector<8x32xf32>
    %151 = math.exp %150 : vector<8x32xf32>
    %cst_37 = arith.constant 1.000000e+00 : f32
    %152 = vector.broadcast %cst_37 : f32 to vector<8x32xf32>
    %153 = arith.addf %152, %151 : vector<8x32xf32>
    %154 = arith.divf %152, %153 : vector<8x32xf32>
    %155 = vector.extract_strided_slice %142 {offsets = [0, 64], sizes = [8, 32], strides = [1, 1]} : vector<8x128xf32> to vector<8x32xf32>
    %156 = math.tanh %155 : vector<8x32xf32>
    %157 = vector.extract_strided_slice %142 {offsets = [0, 96], sizes = [8, 32], strides = [1, 1]} : vector<8x128xf32> to vector<8x32xf32>
    %158 = arith.negf %157 : vector<8x32xf32>
    %159 = math.exp %158 : vector<8x32xf32>
    %cst_38 = arith.constant 1.000000e+00 : f32
    %160 = vector.broadcast %cst_38 : f32 to vector<8x32xf32>
    %161 = arith.addf %160, %159 : vector<8x32xf32>
    %162 = arith.divf %160, %161 : vector<8x32xf32>
    %163 = arith.mulf %154, %132 : vector<8x32xf32>
    %164 = arith.mulf %148, %156 : vector<8x32xf32>
    %165 = arith.addf %163, %164 : vector<8x32xf32>
    %166 = math.tanh %165 : vector<8x32xf32>
    %167 = arith.mulf %162, %166 : vector<8x32xf32>
    %168 = arith.index_cast %138 : i32 to index
    %c0_39 = arith.constant 0 : index
    %169 = vector.load %arg7[%168, %c0_39] : memref<64x32xf32, #tpu.memory_space<vmem>>, vector<8x32xf32>
    tpu.vector_store %arg7[%168, %c0_39], %167 {strides = array<i32>} : memref<64x32xf32, #tpu.memory_space<vmem>>, vector<8x32xf32>,
    %c5_i32 = arith.constant 5 : i32
    %c8_i32_40 = arith.constant 8 : i32
    %170 = arith.muli %c5_i32, %c8_i32_40 : i32
    %171 = tpu.assume_multiple %170, 8 : i32
    %172 = arith.index_cast %171 : i32 to index
    %c0_41 = arith.constant 0 : index
    %173 = vector.load %arg0[%172, %c0_41] : memref<64x128xf32, #tpu.memory_space<vmem>>, vector<8x128xf32>
    %cst_42 = arith.constant dense<0.000000e+00> : vector<8x128xf32>
    %174 = tpu.matmul %167, %4, %cst_42 {dimension_numbers = #tpu.dot_dimension_numbers<[1], [0], [0], [1], [0, 0, 1, 1], [], []>} : vector<8x32xf32>, vector<32x128xf32>, vector<8x128xf32> -> vector<8x128xf32>
    %175 = arith.addf %173, %174 : vector<8x128xf32>
    %176 = vector.extract_strided_slice %175 {offsets = [0, 0], sizes = [8, 32], strides = [1, 1]} : vector<8x128xf32> to vector<8x32xf32>
    %177 = arith.negf %176 : vector<8x32xf32>
    %178 = math.exp %177 : vector<8x32xf32>
    %cst_43 = arith.constant 1.000000e+00 : f32
    %179 = vector.broadcast %cst_43 : f32 to vector<8x32xf32>
    %180 = arith.addf %179, %178 : vector<8x32xf32>
    %181 = arith.divf %179, %180 : vector<8x32xf32>
    %182 = vector.extract_strided_slice %175 {offsets = [0, 32], sizes = [8, 32], strides = [1, 1]} : vector<8x128xf32> to vector<8x32xf32>
    %183 = arith.negf %182 : vector<8x32xf32>
    %184 = math.exp %183 : vector<8x32xf32>
    %cst_44 = arith.constant 1.000000e+00 : f32
    %185 = vector.broadcast %cst_44 : f32 to vector<8x32xf32>
    %186 = arith.addf %185, %184 : vector<8x32xf32>
    %187 = arith.divf %185, %186 : vector<8x32xf32>
    %188 = vector.extract_strided_slice %175 {offsets = [0, 64], sizes = [8, 32], strides = [1, 1]} : vector<8x128xf32> to vector<8x32xf32>
    %189 = math.tanh %188 : vector<8x32xf32>
    %190 = vector.extract_strided_slice %175 {offsets = [0, 96], sizes = [8, 32], strides = [1, 1]} : vector<8x128xf32> to vector<8x32xf32>
    %191 = arith.negf %190 : vector<8x32xf32>
    %192 = math.exp %191 : vector<8x32xf32>
    %cst_45 = arith.constant 1.000000e+00 : f32
    %193 = vector.broadcast %cst_45 : f32 to vector<8x32xf32>
    %194 = arith.addf %193, %192 : vector<8x32xf32>
    %195 = arith.divf %193, %194 : vector<8x32xf32>
    %196 = arith.mulf %187, %165 : vector<8x32xf32>
    %197 = arith.mulf %181, %189 : vector<8x32xf32>
    %198 = arith.addf %196, %197 : vector<8x32xf32>
    %199 = math.tanh %198 : vector<8x32xf32>
    %200 = arith.mulf %195, %199 : vector<8x32xf32>
    %201 = arith.index_cast %171 : i32 to index
    %c0_46 = arith.constant 0 : index
    %202 = vector.load %arg7[%201, %c0_46] : memref<64x32xf32, #tpu.memory_space<vmem>>, vector<8x32xf32>
    tpu.vector_store %arg7[%201, %c0_46], %200 {strides = array<i32>} : memref<64x32xf32, #tpu.memory_space<vmem>>, vector<8x32xf32>,
    %c6_i32 = arith.constant 6 : i32
    %c8_i32_47 = arith.constant 8 : i32
    %203 = arith.muli %c6_i32, %c8_i32_47 : i32
    %204 = tpu.assume_multiple %203, 8 : i32
    %205 = arith.index_cast %204 : i32 to index
    %c0_48 = arith.constant 0 : index
    %206 = vector.load %arg0[%205, %c0_48] : memref<64x128xf32, #tpu.memory_space<vmem>>, vector<8x128xf32>
    %cst_49 = arith.constant dense<0.000000e+00> : vector<8x128xf32>
    %207 = tpu.matmul %200, %4, %cst_49 {dimension_numbers = #tpu.dot_dimension_numbers<[1], [0], [0], [1], [0, 0, 1, 1], [], []>} : vector<8x32xf32>, vector<32x128xf32>, vector<8x128xf32> -> vector<8x128xf32>
    %208 = arith.addf %206, %207 : vector<8x128xf32>
    %209 = vector.extract_strided_slice %208 {offsets = [0, 0], sizes = [8, 32], strides = [1, 1]} : vector<8x128xf32> to vector<8x32xf32>
    %210 = arith.negf %209 : vector<8x32xf32>
    %211 = math.exp %210 : vector<8x32xf32>
    %cst_50 = arith.constant 1.000000e+00 : f32
    %212 = vector.broadcast %cst_50 : f32 to vector<8x32xf32>
    %213 = arith.addf %212, %211 : vector<8x32xf32>
    %214 = arith.divf %212, %213 : vector<8x32xf32>
    %215 = vector.extract_strided_slice %208 {offsets = [0, 32], sizes = [8, 32], strides = [1, 1]} : vector<8x128xf32> to vector<8x32xf32>
    %216 = arith.negf %215 : vector<8x32xf32>
    %217 = math.exp %216 : vector<8x32xf32>
    %cst_51 = arith.constant 1.000000e+00 : f32
    %218 = vector.broadcast %cst_51 : f32 to vector<8x32xf32>
    %219 = arith.addf %218, %217 : vector<8x32xf32>
    %220 = arith.divf %218, %219 : vector<8x32xf32>
    %221 = vector.extract_strided_slice %208 {offsets = [0, 64], sizes = [8, 32], strides = [1, 1]} : vector<8x128xf32> to vector<8x32xf32>
    %222 = math.tanh %221 : vector<8x32xf32>
    %223 = vector.extract_strided_slice %208 {offsets = [0, 96], sizes = [8, 32], strides = [1, 1]} : vector<8x128xf32> to vector<8x32xf32>
    %224 = arith.negf %223 : vector<8x32xf32>
    %225 = math.exp %224 : vector<8x32xf32>
    %cst_52 = arith.constant 1.000000e+00 : f32
    %226 = vector.broadcast %cst_52 : f32 to vector<8x32xf32>
    %227 = arith.addf %226, %225 : vector<8x32xf32>
    %228 = arith.divf %226, %227 : vector<8x32xf32>
    %229 = arith.mulf %220, %198 : vector<8x32xf32>
    %230 = arith.mulf %214, %222 : vector<8x32xf32>
    %231 = arith.addf %229, %230 : vector<8x32xf32>
    %232 = math.tanh %231 : vector<8x32xf32>
    %233 = arith.mulf %228, %232 : vector<8x32xf32>
    %234 = arith.index_cast %204 : i32 to index
    %c0_53 = arith.constant 0 : index
    %235 = vector.load %arg7[%234, %c0_53] : memref<64x32xf32, #tpu.memory_space<vmem>>, vector<8x32xf32>
    tpu.vector_store %arg7[%234, %c0_53], %233 {strides = array<i32>} : memref<64x32xf32, #tpu.memory_space<vmem>>, vector<8x32xf32>,
    %c7_i32 = arith.constant 7 : i32
    %c8_i32_54 = arith.constant 8 : i32
    %236 = arith.muli %c7_i32, %c8_i32_54 : i32
    %237 = tpu.assume_multiple %236, 8 : i32
    %238 = arith.index_cast %237 : i32 to index
    %c0_55 = arith.constant 0 : index
    %239 = vector.load %arg0[%238, %c0_55] : memref<64x128xf32, #tpu.memory_space<vmem>>, vector<8x128xf32>
    %cst_56 = arith.constant dense<0.000000e+00> : vector<8x128xf32>
    %240 = tpu.matmul %233, %4, %cst_56 {dimension_numbers = #tpu.dot_dimension_numbers<[1], [0], [0], [1], [0, 0, 1, 1], [], []>} : vector<8x32xf32>, vector<32x128xf32>, vector<8x128xf32> -> vector<8x128xf32>
    %241 = arith.addf %239, %240 : vector<8x128xf32>
    %242 = vector.extract_strided_slice %241 {offsets = [0, 0], sizes = [8, 32], strides = [1, 1]} : vector<8x128xf32> to vector<8x32xf32>
    %243 = arith.negf %242 : vector<8x32xf32>
    %244 = math.exp %243 : vector<8x32xf32>
    %cst_57 = arith.constant 1.000000e+00 : f32
    %245 = vector.broadcast %cst_57 : f32 to vector<8x32xf32>
    %246 = arith.addf %245, %244 : vector<8x32xf32>
    %247 = arith.divf %245, %246 : vector<8x32xf32>
    %248 = vector.extract_strided_slice %241 {offsets = [0, 32], sizes = [8, 32], strides = [1, 1]} : vector<8x128xf32> to vector<8x32xf32>
    %249 = arith.negf %248 : vector<8x32xf32>
    %250 = math.exp %249 : vector<8x32xf32>
    %cst_58 = arith.constant 1.000000e+00 : f32
    %251 = vector.broadcast %cst_58 : f32 to vector<8x32xf32>
    %252 = arith.addf %251, %250 : vector<8x32xf32>
    %253 = arith.divf %251, %252 : vector<8x32xf32>
    %254 = vector.extract_strided_slice %241 {offsets = [0, 64], sizes = [8, 32], strides = [1, 1]} : vector<8x128xf32> to vector<8x32xf32>
    %255 = math.tanh %254 : vector<8x32xf32>
    %256 = vector.extract_strided_slice %241 {offsets = [0, 96], sizes = [8, 32], strides = [1, 1]} : vector<8x128xf32> to vector<8x32xf32>
    %257 = arith.negf %256 : vector<8x32xf32>
    %258 = math.exp %257 : vector<8x32xf32>
    %cst_59 = arith.constant 1.000000e+00 : f32
    %259 = vector.broadcast %cst_59 : f32 to vector<8x32xf32>
    %260 = arith.addf %259, %258 : vector<8x32xf32>
    %261 = arith.divf %259, %260 : vector<8x32xf32>
    %262 = arith.mulf %253, %231 : vector<8x32xf32>
    %263 = arith.mulf %247, %255 : vector<8x32xf32>
    %264 = arith.addf %262, %263 : vector<8x32xf32>
    %265 = math.tanh %264 : vector<8x32xf32>
    %266 = arith.mulf %261, %265 : vector<8x32xf32>
    %267 = arith.index_cast %237 : i32 to index
    %c0_60 = arith.constant 0 : index
    %268 = vector.load %arg7[%267, %c0_60] : memref<64x32xf32, #tpu.memory_space<vmem>>, vector<8x32xf32>
    tpu.vector_store %arg7[%267, %c0_60], %266 {strides = array<i32>} : memref<64x32xf32, #tpu.memory_space<vmem>>, vector<8x32xf32>,
    %c8_i32_61 = arith.constant 8 : i32
    %c0_62 = arith.constant 0 : index
    %c0_63 = arith.constant 0 : index
    %c0_64 = arith.constant 0 : index
    %269 = vector.load %arg8[%c0_62, %c0_63, %c0_64] : memref<2x8x32xf32, #tpu.memory_space<vmem>>, vector<1x8x32xf32>
    %270 = vector.shape_cast %269 : vector<1x8x32xf32> to vector<8x32xf32>
    %271 = vector.shape_cast %266 : vector<8x32xf32> to vector<1x8x32xf32>
    tpu.vector_store %arg8[%c0_62, %c0_63, %c0_64], %271 {strides = array<i32>} : memref<2x8x32xf32, #tpu.memory_space<vmem>>, vector<1x8x32xf32>,
    %c0_65 = arith.constant 0 : index
    %c0_66 = arith.constant 0 : index
    %c0_67 = arith.constant 0 : index
    %272 = vector.load %arg9[%c0_65, %c0_66, %c0_67] : memref<2x8x32xf32, #tpu.memory_space<vmem>>, vector<1x8x32xf32>
    %273 = vector.shape_cast %272 : vector<1x8x32xf32> to vector<8x32xf32>
    %274 = vector.shape_cast %264 : vector<8x32xf32> to vector<1x8x32xf32>
    tpu.vector_store %arg9[%c0_65, %c0_66, %c0_67], %274 {strides = array<i32>} : memref<2x8x32xf32, #tpu.memory_space<vmem>>, vector<1x8x32xf32>,
    %c0_68 = arith.constant 0 : index
    %c0_69 = arith.constant 0 : index
    %275 = vector.load %arg7[%c0_68, %c0_69] : memref<64x32xf32, #tpu.memory_space<vmem>>, vector<64x32xf32>
    %c0_70 = arith.constant 0 : index
    %c0_71 = arith.constant 0 : index
    %276 = vector.load %arg4[%c0_70, %c0_71] : memref<32x128xf32, #tpu.memory_space<vmem>>, vector<32x128xf32>
    %cst_72 = arith.constant dense<0.000000e+00> : vector<64x128xf32>
    %277 = tpu.matmul %275, %276, %cst_72 {dimension_numbers = #tpu.dot_dimension_numbers<[1], [0], [0], [1], [0, 0, 1, 1], [], []>} : vector<64x32xf32>, vector<32x128xf32>, vector<64x128xf32> -> vector<64x128xf32>
    %c0_73 = arith.constant 0 : index
    %c0_74 = arith.constant 0 : index
    %278 = vector.load %arg6[%c0_73, %c0_74] : memref<1x128xf32, #tpu.memory_space<vmem>>, vector<1x128xf32>
    %279 = vector.broadcast %278 : vector<1x128xf32> to vector<64x128xf32>
    %280 = arith.addf %277, %279 : vector<64x128xf32>
    %c0_75 = arith.constant 0 : index
    %c0_76 = arith.constant 0 : index
    %281 = vector.load %arg10[%c0_75, %c0_76] : memref<64x128xf32, #tpu.memory_space<vmem>>, vector<64x128xf32>
    tpu.vector_store %arg10[%c0_75, %c0_76], %280 {strides = array<i32>} : memref<64x128xf32, #tpu.memory_space<vmem>>, vector<64x128xf32>,
    %c1 = arith.constant 1 : index
    %c0_77 = arith.constant 0 : index
    %c0_78 = arith.constant 0 : index
    %282 = vector.load %arg1[%c1, %c0_77, %c0_78] : memref<2x8x32xf32, #tpu.memory_space<vmem>>, vector<1x8x32xf32>
    %283 = vector.shape_cast %282 : vector<1x8x32xf32> to vector<8x32xf32>
    %c1_79 = arith.constant 1 : index
    %c0_80 = arith.constant 0 : index
    %c0_81 = arith.constant 0 : index
    %284 = vector.load %arg2[%c1_79, %c0_80, %c0_81] : memref<2x8x32xf32, #tpu.memory_space<vmem>>, vector<1x8x32xf32>
    %285 = vector.shape_cast %284 : vector<1x8x32xf32> to vector<8x32xf32>
    %c0_82 = arith.constant 0 : index
    %c0_83 = arith.constant 0 : index
    %286 = vector.load %arg5[%c0_82, %c0_83] : memref<32x128xf32, #tpu.memory_space<vmem>>, vector<32x128xf32>
    %c0_i32_84 = arith.constant 0 : i32
    %c8_i32_85 = arith.constant 8 : i32
    %287 = arith.muli %c0_i32_84, %c8_i32_85 : i32
    %288 = tpu.assume_multiple %287, 8 : i32
    %289 = arith.index_cast %288 : i32 to index
    %c0_86 = arith.constant 0 : index
    %290 = vector.load %arg10[%289, %c0_86] : memref<64x128xf32, #tpu.memory_space<vmem>>, vector<8x128xf32>
    %cst_87 = arith.constant dense<0.000000e+00> : vector<8x128xf32>
    %291 = tpu.matmul %283, %286, %cst_87 {dimension_numbers = #tpu.dot_dimension_numbers<[1], [0], [0], [1], [0, 0, 1, 1], [], []>} : vector<8x32xf32>, vector<32x128xf32>, vector<8x128xf32> -> vector<8x128xf32>
    %292 = arith.addf %290, %291 : vector<8x128xf32>
    %293 = vector.extract_strided_slice %292 {offsets = [0, 0], sizes = [8, 32], strides = [1, 1]} : vector<8x128xf32> to vector<8x32xf32>
    %294 = arith.negf %293 : vector<8x32xf32>
    %295 = math.exp %294 : vector<8x32xf32>
    %cst_88 = arith.constant 1.000000e+00 : f32
    %296 = vector.broadcast %cst_88 : f32 to vector<8x32xf32>
    %297 = arith.addf %296, %295 : vector<8x32xf32>
    %298 = arith.divf %296, %297 : vector<8x32xf32>
    %299 = vector.extract_strided_slice %292 {offsets = [0, 32], sizes = [8, 32], strides = [1, 1]} : vector<8x128xf32> to vector<8x32xf32>
    %300 = arith.negf %299 : vector<8x32xf32>
    %301 = math.exp %300 : vector<8x32xf32>
    %cst_89 = arith.constant 1.000000e+00 : f32
    %302 = vector.broadcast %cst_89 : f32 to vector<8x32xf32>
    %303 = arith.addf %302, %301 : vector<8x32xf32>
    %304 = arith.divf %302, %303 : vector<8x32xf32>
    %305 = vector.extract_strided_slice %292 {offsets = [0, 64], sizes = [8, 32], strides = [1, 1]} : vector<8x128xf32> to vector<8x32xf32>
    %306 = math.tanh %305 : vector<8x32xf32>
    %307 = vector.extract_strided_slice %292 {offsets = [0, 96], sizes = [8, 32], strides = [1, 1]} : vector<8x128xf32> to vector<8x32xf32>
    %308 = arith.negf %307 : vector<8x32xf32>
    %309 = math.exp %308 : vector<8x32xf32>
    %cst_90 = arith.constant 1.000000e+00 : f32
    %310 = vector.broadcast %cst_90 : f32 to vector<8x32xf32>
    %311 = arith.addf %310, %309 : vector<8x32xf32>
    %312 = arith.divf %310, %311 : vector<8x32xf32>
    %313 = arith.mulf %304, %285 : vector<8x32xf32>
    %314 = arith.mulf %298, %306 : vector<8x32xf32>
    %315 = arith.addf %313, %314 : vector<8x32xf32>
    %316 = math.tanh %315 : vector<8x32xf32>
    %317 = arith.mulf %312, %316 : vector<8x32xf32>
    %318 = arith.index_cast %288 : i32 to index
    %c0_91 = arith.constant 0 : index
    %319 = vector.load %arg7[%318, %c0_91] : memref<64x32xf32, #tpu.memory_space<vmem>>, vector<8x32xf32>
    tpu.vector_store %arg7[%318, %c0_91], %317 {strides = array<i32>} : memref<64x32xf32, #tpu.memory_space<vmem>>, vector<8x32xf32>,
    %c1_i32_92 = arith.constant 1 : i32
    %c8_i32_93 = arith.constant 8 : i32
    %320 = arith.muli %c1_i32_92, %c8_i32_93 : i32
    %321 = tpu.assume_multiple %320, 8 : i32
    %322 = arith.index_cast %321 : i32 to index
    %c0_94 = arith.constant 0 : index
    %323 = vector.load %arg10[%322, %c0_94] : memref<64x128xf32, #tpu.memory_space<vmem>>, vector<8x128xf32>
    %cst_95 = arith.constant dense<0.000000e+00> : vector<8x128xf32>
    %324 = tpu.matmul %317, %286, %cst_95 {dimension_numbers = #tpu.dot_dimension_numbers<[1], [0], [0], [1], [0, 0, 1, 1], [], []>} : vector<8x32xf32>, vector<32x128xf32>, vector<8x128xf32> -> vector<8x128xf32>
    %325 = arith.addf %323, %324 : vector<8x128xf32>
    %326 = vector.extract_strided_slice %325 {offsets = [0, 0], sizes = [8, 32], strides = [1, 1]} : vector<8x128xf32> to vector<8x32xf32>
    %327 = arith.negf %326 : vector<8x32xf32>
    %328 = math.exp %327 : vector<8x32xf32>
    %cst_96 = arith.constant 1.000000e+00 : f32
    %329 = vector.broadcast %cst_96 : f32 to vector<8x32xf32>
    %330 = arith.addf %329, %328 : vector<8x32xf32>
    %331 = arith.divf %329, %330 : vector<8x32xf32>
    %332 = vector.extract_strided_slice %325 {offsets = [0, 32], sizes = [8, 32], strides = [1, 1]} : vector<8x128xf32> to vector<8x32xf32>
    %333 = arith.negf %332 : vector<8x32xf32>
    %334 = math.exp %333 : vector<8x32xf32>
    %cst_97 = arith.constant 1.000000e+00 : f32
    %335 = vector.broadcast %cst_97 : f32 to vector<8x32xf32>
    %336 = arith.addf %335, %334 : vector<8x32xf32>
    %337 = arith.divf %335, %336 : vector<8x32xf32>
    %338 = vector.extract_strided_slice %325 {offsets = [0, 64], sizes = [8, 32], strides = [1, 1]} : vector<8x128xf32> to vector<8x32xf32>
    %339 = math.tanh %338 : vector<8x32xf32>
    %340 = vector.extract_strided_slice %325 {offsets = [0, 96], sizes = [8, 32], strides = [1, 1]} : vector<8x128xf32> to vector<8x32xf32>
    %341 = arith.negf %340 : vector<8x32xf32>
    %342 = math.exp %341 : vector<8x32xf32>
    %cst_98 = arith.constant 1.000000e+00 : f32
    %343 = vector.broadcast %cst_98 : f32 to vector<8x32xf32>
    %344 = arith.addf %343, %342 : vector<8x32xf32>
    %345 = arith.divf %343, %344 : vector<8x32xf32>
    %346 = arith.mulf %337, %315 : vector<8x32xf32>
    %347 = arith.mulf %331, %339 : vector<8x32xf32>
    %348 = arith.addf %346, %347 : vector<8x32xf32>
    %349 = math.tanh %348 : vector<8x32xf32>
    %350 = arith.mulf %345, %349 : vector<8x32xf32>
    %351 = arith.index_cast %321 : i32 to index
    %c0_99 = arith.constant 0 : index
    %352 = vector.load %arg7[%351, %c0_99] : memref<64x32xf32, #tpu.memory_space<vmem>>, vector<8x32xf32>
    tpu.vector_store %arg7[%351, %c0_99], %350 {strides = array<i32>} : memref<64x32xf32, #tpu.memory_space<vmem>>, vector<8x32xf32>,
    %c2_i32_100 = arith.constant 2 : i32
    %c8_i32_101 = arith.constant 8 : i32
    %353 = arith.muli %c2_i32_100, %c8_i32_101 : i32
    %354 = tpu.assume_multiple %353, 8 : i32
    %355 = arith.index_cast %354 : i32 to index
    %c0_102 = arith.constant 0 : index
    %356 = vector.load %arg10[%355, %c0_102] : memref<64x128xf32, #tpu.memory_space<vmem>>, vector<8x128xf32>
    %cst_103 = arith.constant dense<0.000000e+00> : vector<8x128xf32>
    %357 = tpu.matmul %350, %286, %cst_103 {dimension_numbers = #tpu.dot_dimension_numbers<[1], [0], [0], [1], [0, 0, 1, 1], [], []>} : vector<8x32xf32>, vector<32x128xf32>, vector<8x128xf32> -> vector<8x128xf32>
    %358 = arith.addf %356, %357 : vector<8x128xf32>
    %359 = vector.extract_strided_slice %358 {offsets = [0, 0], sizes = [8, 32], strides = [1, 1]} : vector<8x128xf32> to vector<8x32xf32>
    %360 = arith.negf %359 : vector<8x32xf32>
    %361 = math.exp %360 : vector<8x32xf32>
    %cst_104 = arith.constant 1.000000e+00 : f32
    %362 = vector.broadcast %cst_104 : f32 to vector<8x32xf32>
    %363 = arith.addf %362, %361 : vector<8x32xf32>
    %364 = arith.divf %362, %363 : vector<8x32xf32>
    %365 = vector.extract_strided_slice %358 {offsets = [0, 32], sizes = [8, 32], strides = [1, 1]} : vector<8x128xf32> to vector<8x32xf32>
    %366 = arith.negf %365 : vector<8x32xf32>
    %367 = math.exp %366 : vector<8x32xf32>
    %cst_105 = arith.constant 1.000000e+00 : f32
    %368 = vector.broadcast %cst_105 : f32 to vector<8x32xf32>
    %369 = arith.addf %368, %367 : vector<8x32xf32>
    %370 = arith.divf %368, %369 : vector<8x32xf32>
    %371 = vector.extract_strided_slice %358 {offsets = [0, 64], sizes = [8, 32], strides = [1, 1]} : vector<8x128xf32> to vector<8x32xf32>
    %372 = math.tanh %371 : vector<8x32xf32>
    %373 = vector.extract_strided_slice %358 {offsets = [0, 96], sizes = [8, 32], strides = [1, 1]} : vector<8x128xf32> to vector<8x32xf32>
    %374 = arith.negf %373 : vector<8x32xf32>
    %375 = math.exp %374 : vector<8x32xf32>
    %cst_106 = arith.constant 1.000000e+00 : f32
    %376 = vector.broadcast %cst_106 : f32 to vector<8x32xf32>
    %377 = arith.addf %376, %375 : vector<8x32xf32>
    %378 = arith.divf %376, %377 : vector<8x32xf32>
    %379 = arith.mulf %370, %348 : vector<8x32xf32>
    %380 = arith.mulf %364, %372 : vector<8x32xf32>
    %381 = arith.addf %379, %380 : vector<8x32xf32>
    %382 = math.tanh %381 : vector<8x32xf32>
    %383 = arith.mulf %378, %382 : vector<8x32xf32>
    %384 = arith.index_cast %354 : i32 to index
    %c0_107 = arith.constant 0 : index
    %385 = vector.load %arg7[%384, %c0_107] : memref<64x32xf32, #tpu.memory_space<vmem>>, vector<8x32xf32>
    tpu.vector_store %arg7[%384, %c0_107], %383 {strides = array<i32>} : memref<64x32xf32, #tpu.memory_space<vmem>>, vector<8x32xf32>,
    %c3_i32_108 = arith.constant 3 : i32
    %c8_i32_109 = arith.constant 8 : i32
    %386 = arith.muli %c3_i32_108, %c8_i32_109 : i32
    %387 = tpu.assume_multiple %386, 8 : i32
    %388 = arith.index_cast %387 : i32 to index
    %c0_110 = arith.constant 0 : index
    %389 = vector.load %arg10[%388, %c0_110] : memref<64x128xf32, #tpu.memory_space<vmem>>, vector<8x128xf32>
    %cst_111 = arith.constant dense<0.000000e+00> : vector<8x128xf32>
    %390 = tpu.matmul %383, %286, %cst_111 {dimension_numbers = #tpu.dot_dimension_numbers<[1], [0], [0], [1], [0, 0, 1, 1], [], []>} : vector<8x32xf32>, vector<32x128xf32>, vector<8x128xf32> -> vector<8x128xf32>
    %391 = arith.addf %389, %390 : vector<8x128xf32>
    %392 = vector.extract_strided_slice %391 {offsets = [0, 0], sizes = [8, 32], strides = [1, 1]} : vector<8x128xf32> to vector<8x32xf32>
    %393 = arith.negf %392 : vector<8x32xf32>
    %394 = math.exp %393 : vector<8x32xf32>
    %cst_112 = arith.constant 1.000000e+00 : f32
    %395 = vector.broadcast %cst_112 : f32 to vector<8x32xf32>
    %396 = arith.addf %395, %394 : vector<8x32xf32>
    %397 = arith.divf %395, %396 : vector<8x32xf32>
    %398 = vector.extract_strided_slice %391 {offsets = [0, 32], sizes = [8, 32], strides = [1, 1]} : vector<8x128xf32> to vector<8x32xf32>
    %399 = arith.negf %398 : vector<8x32xf32>
    %400 = math.exp %399 : vector<8x32xf32>
    %cst_113 = arith.constant 1.000000e+00 : f32
    %401 = vector.broadcast %cst_113 : f32 to vector<8x32xf32>
    %402 = arith.addf %401, %400 : vector<8x32xf32>
    %403 = arith.divf %401, %402 : vector<8x32xf32>
    %404 = vector.extract_strided_slice %391 {offsets = [0, 64], sizes = [8, 32], strides = [1, 1]} : vector<8x128xf32> to vector<8x32xf32>
    %405 = math.tanh %404 : vector<8x32xf32>
    %406 = vector.extract_strided_slice %391 {offsets = [0, 96], sizes = [8, 32], strides = [1, 1]} : vector<8x128xf32> to vector<8x32xf32>
    %407 = arith.negf %406 : vector<8x32xf32>
    %408 = math.exp %407 : vector<8x32xf32>
    %cst_114 = arith.constant 1.000000e+00 : f32
    %409 = vector.broadcast %cst_114 : f32 to vector<8x32xf32>
    %410 = arith.addf %409, %408 : vector<8x32xf32>
    %411 = arith.divf %409, %410 : vector<8x32xf32>
    %412 = arith.mulf %403, %381 : vector<8x32xf32>
    %413 = arith.mulf %397, %405 : vector<8x32xf32>
    %414 = arith.addf %412, %413 : vector<8x32xf32>
    %415 = math.tanh %414 : vector<8x32xf32>
    %416 = arith.mulf %411, %415 : vector<8x32xf32>
    %417 = arith.index_cast %387 : i32 to index
    %c0_115 = arith.constant 0 : index
    %418 = vector.load %arg7[%417, %c0_115] : memref<64x32xf32, #tpu.memory_space<vmem>>, vector<8x32xf32>
    tpu.vector_store %arg7[%417, %c0_115], %416 {strides = array<i32>} : memref<64x32xf32, #tpu.memory_space<vmem>>, vector<8x32xf32>,
    %c4_i32_116 = arith.constant 4 : i32
    %c8_i32_117 = arith.constant 8 : i32
    %419 = arith.muli %c4_i32_116, %c8_i32_117 : i32
    %420 = tpu.assume_multiple %419, 8 : i32
    %421 = arith.index_cast %420 : i32 to index
    %c0_118 = arith.constant 0 : index
    %422 = vector.load %arg10[%421, %c0_118] : memref<64x128xf32, #tpu.memory_space<vmem>>, vector<8x128xf32>
    %cst_119 = arith.constant dense<0.000000e+00> : vector<8x128xf32>
    %423 = tpu.matmul %416, %286, %cst_119 {dimension_numbers = #tpu.dot_dimension_numbers<[1], [0], [0], [1], [0, 0, 1, 1], [], []>} : vector<8x32xf32>, vector<32x128xf32>, vector<8x128xf32> -> vector<8x128xf32>
    %424 = arith.addf %422, %423 : vector<8x128xf32>
    %425 = vector.extract_strided_slice %424 {offsets = [0, 0], sizes = [8, 32], strides = [1, 1]} : vector<8x128xf32> to vector<8x32xf32>
    %426 = arith.negf %425 : vector<8x32xf32>
    %427 = math.exp %426 : vector<8x32xf32>
    %cst_120 = arith.constant 1.000000e+00 : f32
    %428 = vector.broadcast %cst_120 : f32 to vector<8x32xf32>
    %429 = arith.addf %428, %427 : vector<8x32xf32>
    %430 = arith.divf %428, %429 : vector<8x32xf32>
    %431 = vector.extract_strided_slice %424 {offsets = [0, 32], sizes = [8, 32], strides = [1, 1]} : vector<8x128xf32> to vector<8x32xf32>
    %432 = arith.negf %431 : vector<8x32xf32>
    %433 = math.exp %432 : vector<8x32xf32>
    %cst_121 = arith.constant 1.000000e+00 : f32
    %434 = vector.broadcast %cst_121 : f32 to vector<8x32xf32>
    %435 = arith.addf %434, %433 : vector<8x32xf32>
    %436 = arith.divf %434, %435 : vector<8x32xf32>
    %437 = vector.extract_strided_slice %424 {offsets = [0, 64], sizes = [8, 32], strides = [1, 1]} : vector<8x128xf32> to vector<8x32xf32>
    %438 = math.tanh %437 : vector<8x32xf32>
    %439 = vector.extract_strided_slice %424 {offsets = [0, 96], sizes = [8, 32], strides = [1, 1]} : vector<8x128xf32> to vector<8x32xf32>
    %440 = arith.negf %439 : vector<8x32xf32>
    %441 = math.exp %440 : vector<8x32xf32>
    %cst_122 = arith.constant 1.000000e+00 : f32
    %442 = vector.broadcast %cst_122 : f32 to vector<8x32xf32>
    %443 = arith.addf %442, %441 : vector<8x32xf32>
    %444 = arith.divf %442, %443 : vector<8x32xf32>
    %445 = arith.mulf %436, %414 : vector<8x32xf32>
    %446 = arith.mulf %430, %438 : vector<8x32xf32>
    %447 = arith.addf %445, %446 : vector<8x32xf32>
    %448 = math.tanh %447 : vector<8x32xf32>
    %449 = arith.mulf %444, %448 : vector<8x32xf32>
    %450 = arith.index_cast %420 : i32 to index
    %c0_123 = arith.constant 0 : index
    %451 = vector.load %arg7[%450, %c0_123] : memref<64x32xf32, #tpu.memory_space<vmem>>, vector<8x32xf32>
    tpu.vector_store %arg7[%450, %c0_123], %449 {strides = array<i32>} : memref<64x32xf32, #tpu.memory_space<vmem>>, vector<8x32xf32>,
    %c5_i32_124 = arith.constant 5 : i32
    %c8_i32_125 = arith.constant 8 : i32
    %452 = arith.muli %c5_i32_124, %c8_i32_125 : i32
    %453 = tpu.assume_multiple %452, 8 : i32
    %454 = arith.index_cast %453 : i32 to index
    %c0_126 = arith.constant 0 : index
    %455 = vector.load %arg10[%454, %c0_126] : memref<64x128xf32, #tpu.memory_space<vmem>>, vector<8x128xf32>
    %cst_127 = arith.constant dense<0.000000e+00> : vector<8x128xf32>
    %456 = tpu.matmul %449, %286, %cst_127 {dimension_numbers = #tpu.dot_dimension_numbers<[1], [0], [0], [1], [0, 0, 1, 1], [], []>} : vector<8x32xf32>, vector<32x128xf32>, vector<8x128xf32> -> vector<8x128xf32>
    %457 = arith.addf %455, %456 : vector<8x128xf32>
    %458 = vector.extract_strided_slice %457 {offsets = [0, 0], sizes = [8, 32], strides = [1, 1]} : vector<8x128xf32> to vector<8x32xf32>
    %459 = arith.negf %458 : vector<8x32xf32>
    %460 = math.exp %459 : vector<8x32xf32>
    %cst_128 = arith.constant 1.000000e+00 : f32
    %461 = vector.broadcast %cst_128 : f32 to vector<8x32xf32>
    %462 = arith.addf %461, %460 : vector<8x32xf32>
    %463 = arith.divf %461, %462 : vector<8x32xf32>
    %464 = vector.extract_strided_slice %457 {offsets = [0, 32], sizes = [8, 32], strides = [1, 1]} : vector<8x128xf32> to vector<8x32xf32>
    %465 = arith.negf %464 : vector<8x32xf32>
    %466 = math.exp %465 : vector<8x32xf32>
    %cst_129 = arith.constant 1.000000e+00 : f32
    %467 = vector.broadcast %cst_129 : f32 to vector<8x32xf32>
    %468 = arith.addf %467, %466 : vector<8x32xf32>
    %469 = arith.divf %467, %468 : vector<8x32xf32>
    %470 = vector.extract_strided_slice %457 {offsets = [0, 64], sizes = [8, 32], strides = [1, 1]} : vector<8x128xf32> to vector<8x32xf32>
    %471 = math.tanh %470 : vector<8x32xf32>
    %472 = vector.extract_strided_slice %457 {offsets = [0, 96], sizes = [8, 32], strides = [1, 1]} : vector<8x128xf32> to vector<8x32xf32>
    %473 = arith.negf %472 : vector<8x32xf32>
    %474 = math.exp %473 : vector<8x32xf32>
    %cst_130 = arith.constant 1.000000e+00 : f32
    %475 = vector.broadcast %cst_130 : f32 to vector<8x32xf32>
    %476 = arith.addf %475, %474 : vector<8x32xf32>
    %477 = arith.divf %475, %476 : vector<8x32xf32>
    %478 = arith.mulf %469, %447 : vector<8x32xf32>
    %479 = arith.mulf %463, %471 : vector<8x32xf32>
    %480 = arith.addf %478, %479 : vector<8x32xf32>
    %481 = math.tanh %480 : vector<8x32xf32>
    %482 = arith.mulf %477, %481 : vector<8x32xf32>
    %483 = arith.index_cast %453 : i32 to index
    %c0_131 = arith.constant 0 : index
    %484 = vector.load %arg7[%483, %c0_131] : memref<64x32xf32, #tpu.memory_space<vmem>>, vector<8x32xf32>
    tpu.vector_store %arg7[%483, %c0_131], %482 {strides = array<i32>} : memref<64x32xf32, #tpu.memory_space<vmem>>, vector<8x32xf32>,
    %c6_i32_132 = arith.constant 6 : i32
    %c8_i32_133 = arith.constant 8 : i32
    %485 = arith.muli %c6_i32_132, %c8_i32_133 : i32
    %486 = tpu.assume_multiple %485, 8 : i32
    %487 = arith.index_cast %486 : i32 to index
    %c0_134 = arith.constant 0 : index
    %488 = vector.load %arg10[%487, %c0_134] : memref<64x128xf32, #tpu.memory_space<vmem>>, vector<8x128xf32>
    %cst_135 = arith.constant dense<0.000000e+00> : vector<8x128xf32>
    %489 = tpu.matmul %482, %286, %cst_135 {dimension_numbers = #tpu.dot_dimension_numbers<[1], [0], [0], [1], [0, 0, 1, 1], [], []>} : vector<8x32xf32>, vector<32x128xf32>, vector<8x128xf32> -> vector<8x128xf32>
    %490 = arith.addf %488, %489 : vector<8x128xf32>
    %491 = vector.extract_strided_slice %490 {offsets = [0, 0], sizes = [8, 32], strides = [1, 1]} : vector<8x128xf32> to vector<8x32xf32>
    %492 = arith.negf %491 : vector<8x32xf32>
    %493 = math.exp %492 : vector<8x32xf32>
    %cst_136 = arith.constant 1.000000e+00 : f32
    %494 = vector.broadcast %cst_136 : f32 to vector<8x32xf32>
    %495 = arith.addf %494, %493 : vector<8x32xf32>
    %496 = arith.divf %494, %495 : vector<8x32xf32>
    %497 = vector.extract_strided_slice %490 {offsets = [0, 32], sizes = [8, 32], strides = [1, 1]} : vector<8x128xf32> to vector<8x32xf32>
    %498 = arith.negf %497 : vector<8x32xf32>
    %499 = math.exp %498 : vector<8x32xf32>
    %cst_137 = arith.constant 1.000000e+00 : f32
    %500 = vector.broadcast %cst_137 : f32 to vector<8x32xf32>
    %501 = arith.addf %500, %499 : vector<8x32xf32>
    %502 = arith.divf %500, %501 : vector<8x32xf32>
    %503 = vector.extract_strided_slice %490 {offsets = [0, 64], sizes = [8, 32], strides = [1, 1]} : vector<8x128xf32> to vector<8x32xf32>
    %504 = math.tanh %503 : vector<8x32xf32>
    %505 = vector.extract_strided_slice %490 {offsets = [0, 96], sizes = [8, 32], strides = [1, 1]} : vector<8x128xf32> to vector<8x32xf32>
    %506 = arith.negf %505 : vector<8x32xf32>
    %507 = math.exp %506 : vector<8x32xf32>
    %cst_138 = arith.constant 1.000000e+00 : f32
    %508 = vector.broadcast %cst_138 : f32 to vector<8x32xf32>
    %509 = arith.addf %508, %507 : vector<8x32xf32>
    %510 = arith.divf %508, %509 : vector<8x32xf32>
    %511 = arith.mulf %502, %480 : vector<8x32xf32>
    %512 = arith.mulf %496, %504 : vector<8x32xf32>
    %513 = arith.addf %511, %512 : vector<8x32xf32>
    %514 = math.tanh %513 : vector<8x32xf32>
    %515 = arith.mulf %510, %514 : vector<8x32xf32>
    %516 = arith.index_cast %486 : i32 to index
    %c0_139 = arith.constant 0 : index
    %517 = vector.load %arg7[%516, %c0_139] : memref<64x32xf32, #tpu.memory_space<vmem>>, vector<8x32xf32>
    tpu.vector_store %arg7[%516, %c0_139], %515 {strides = array<i32>} : memref<64x32xf32, #tpu.memory_space<vmem>>, vector<8x32xf32>,
    %c7_i32_140 = arith.constant 7 : i32
    %c8_i32_141 = arith.constant 8 : i32
    %518 = arith.muli %c7_i32_140, %c8_i32_141 : i32
    %519 = tpu.assume_multiple %518, 8 : i32
    %520 = arith.index_cast %519 : i32 to index
    %c0_142 = arith.constant 0 : index
    %521 = vector.load %arg10[%520, %c0_142] : memref<64x128xf32, #tpu.memory_space<vmem>>, vector<8x128xf32>
    %cst_143 = arith.constant dense<0.000000e+00> : vector<8x128xf32>
    %522 = tpu.matmul %515, %286, %cst_143 {dimension_numbers = #tpu.dot_dimension_numbers<[1], [0], [0], [1], [0, 0, 1, 1], [], []>} : vector<8x32xf32>, vector<32x128xf32>, vector<8x128xf32> -> vector<8x128xf32>
    %523 = arith.addf %521, %522 : vector<8x128xf32>
    %524 = vector.extract_strided_slice %523 {offsets = [0, 0], sizes = [8, 32], strides = [1, 1]} : vector<8x128xf32> to vector<8x32xf32>
    %525 = arith.negf %524 : vector<8x32xf32>
    %526 = math.exp %525 : vector<8x32xf32>
    %cst_144 = arith.constant 1.000000e+00 : f32
    %527 = vector.broadcast %cst_144 : f32 to vector<8x32xf32>
    %528 = arith.addf %527, %526 : vector<8x32xf32>
    %529 = arith.divf %527, %528 : vector<8x32xf32>
    %530 = vector.extract_strided_slice %523 {offsets = [0, 32], sizes = [8, 32], strides = [1, 1]} : vector<8x128xf32> to vector<8x32xf32>
    %531 = arith.negf %530 : vector<8x32xf32>
    %532 = math.exp %531 : vector<8x32xf32>
    %cst_145 = arith.constant 1.000000e+00 : f32
    %533 = vector.broadcast %cst_145 : f32 to vector<8x32xf32>
    %534 = arith.addf %533, %532 : vector<8x32xf32>
    %535 = arith.divf %533, %534 : vector<8x32xf32>
    %536 = vector.extract_strided_slice %523 {offsets = [0, 64], sizes = [8, 32], strides = [1, 1]} : vector<8x128xf32> to vector<8x32xf32>
    %537 = math.tanh %536 : vector<8x32xf32>
    %538 = vector.extract_strided_slice %523 {offsets = [0, 96], sizes = [8, 32], strides = [1, 1]} : vector<8x128xf32> to vector<8x32xf32>
    %539 = arith.negf %538 : vector<8x32xf32>
    %540 = math.exp %539 : vector<8x32xf32>
    %cst_146 = arith.constant 1.000000e+00 : f32
    %541 = vector.broadcast %cst_146 : f32 to vector<8x32xf32>
    %542 = arith.addf %541, %540 : vector<8x32xf32>
    %543 = arith.divf %541, %542 : vector<8x32xf32>
    %544 = arith.mulf %535, %513 : vector<8x32xf32>
    %545 = arith.mulf %529, %537 : vector<8x32xf32>
    %546 = arith.addf %544, %545 : vector<8x32xf32>
    %547 = math.tanh %546 : vector<8x32xf32>
    %548 = arith.mulf %543, %547 : vector<8x32xf32>
    %549 = arith.index_cast %519 : i32 to index
    %c0_147 = arith.constant 0 : index
    %550 = vector.load %arg7[%549, %c0_147] : memref<64x32xf32, #tpu.memory_space<vmem>>, vector<8x32xf32>
    tpu.vector_store %arg7[%549, %c0_147], %548 {strides = array<i32>} : memref<64x32xf32, #tpu.memory_space<vmem>>, vector<8x32xf32>,
    %c8_i32_148 = arith.constant 8 : i32
    %c1_149 = arith.constant 1 : index
    %c0_150 = arith.constant 0 : index
    %c0_151 = arith.constant 0 : index
    %551 = vector.load %arg8[%c1_149, %c0_150, %c0_151] : memref<2x8x32xf32, #tpu.memory_space<vmem>>, vector<1x8x32xf32>
    %552 = vector.shape_cast %551 : vector<1x8x32xf32> to vector<8x32xf32>
    %553 = vector.shape_cast %548 : vector<8x32xf32> to vector<1x8x32xf32>
    tpu.vector_store %arg8[%c1_149, %c0_150, %c0_151], %553 {strides = array<i32>} : memref<2x8x32xf32, #tpu.memory_space<vmem>>, vector<1x8x32xf32>,
    %c1_152 = arith.constant 1 : index
    %c0_153 = arith.constant 0 : index
    %c0_154 = arith.constant 0 : index
    %554 = vector.load %arg9[%c1_152, %c0_153, %c0_154] : memref<2x8x32xf32, #tpu.memory_space<vmem>>, vector<1x8x32xf32>
    %555 = vector.shape_cast %554 : vector<1x8x32xf32> to vector<8x32xf32>
    %556 = vector.shape_cast %546 : vector<8x32xf32> to vector<1x8x32xf32>
    tpu.vector_store %arg9[%c1_152, %c0_153, %c0_154], %556 {strides = array<i32>} : memref<2x8x32xf32, #tpu.memory_space<vmem>>, vector<1x8x32xf32>,
    return
  }
}

</mosaic_0001>

<llo_original>
// kernel: tpu_custom_call.1
$region0: #{tpu_custom_call.1}
  #allocation0 [shape = 'u32[]', space=smem, size = 0x4, offset = 0x4, fixed_abs, tag = 'smem constant byte address 0x4 - core index']
  #allocation1 [shape = 'u32[72,128]{1,0:T(1,128)}', space=vmem, size = 0x9000, scoped, tag = 'internal scratch']
  #allocation2 [shape = 'f32[64,128]{1,0:T(8,128)}', space=vmem, size = 0x8000, scoped, tag = 'scratch operand']
  %s0 = inlined_call_operand.hbm [shape: f32[64,128], index: 0, kind: input, shape index: {}]
  %s1 = inlined_call_operand.hbm [shape: f32[2,8,32], index: 1, kind: input, shape index: {}]
  %s2 = inlined_call_operand.hbm [shape: f32[2,8,32], index: 2, kind: input, shape index: {}]
  %s3 = inlined_call_operand.hbm [shape: f32[32,128], index: 3, kind: input, shape index: {}]
  %s4 = inlined_call_operand.hbm [shape: f32[32,128], index: 4, kind: input, shape index: {}]
  %s5 = inlined_call_operand.hbm [shape: f32[32,128], index: 5, kind: input, shape index: {}]
  %s6 = inlined_call_operand.vmem [shape: f32[1,128], index: 6, kind: input, shape index: {}]
  %s7 = inlined_call_operand.vmem [shape: f32[64,32], index: 7, kind: output, shape index: {0}]
  %s8 = inlined_call_operand.hbm [shape: f32[2,8,32], index: 8, kind: output, shape index: {1}]
  %s9 = inlined_call_operand.hbm [shape: f32[2,8,32], index: 9, kind: output, shape index: {2}]
  %10 = xla_tuple %s7, %s8, %s9
  %s11 = sld [smem:[#allocation0]]
  $region78: #{tpu_custom_call.1} parent=0
    _
  %s13 = ssub.s32 1, %s11
  %s14 = scalar_select 0, %s13, %s11
  $region1: #{tpu_custom_call.1} parent=0
    #allocation3 [shape = 'u8[32768]{0}', space=vmem, size = 0x8000, scoped, tag = 'input window, operand 0, single buffered']
    #allocation4 [shape = 's32[1]{0}', space=sflag, size = 0x4, scoped, tag = 'scoped memory for tpu_custom_call.1']
    #allocation5 [shape = 's32[1]{0}', space=sflag, size = 0x4, scoped, tag = 'scoped memory for tpu_custom_call.1']
    #allocation6 [shape = 'u8[8192]{0}', space=vmem, size = 0x2000, scoped, tag = 'input window, operand 1, single buffered']
    #allocation7 [shape = 's32[1]{0}', space=sflag, size = 0x4, scoped, tag = 'scoped memory for tpu_custom_call.1']
    #allocation8 [shape = 'u8[8192]{0}', space=vmem, size = 0x2000, scoped, tag = 'input window, operand 2, single buffered']
    #allocation9 [shape = 'u8[16384]{0}', space=vmem, size = 0x4000, scoped, tag = 'input window, operand 3, single buffered']
    #allocation10 [shape = 's32[1]{0}', space=sflag, size = 0x4, scoped, tag = 'scoped memory for tpu_custom_call.1']
    #allocation11 [shape = 'u8[16384]{0}', space=vmem, size = 0x4000, scoped, tag = 'input window, operand 4, single buffered']
    #allocation12 [shape = 'u8[16384]{0}', space=vmem, size = 0x4000, scoped, tag = 'input window, operand 5, single buffered']
    #allocation13 [shape = 's32[1]{0}', space=sflag, size = 0x4, scoped, tag = 'scoped memory for tpu_custom_call.1']
    #allocation14 [shape = 'u8[8192]{0}', space=vmem, size = 0x2000, scoped, tag = 'output window, operand 1, single buffered']
    #allocation15 [shape = 'u8[8192]{0}', space=vmem, size = 0x2000, scoped, tag = 'output window, operand 2, single buffered']
    #allocation16 [shape = 's32[1]{0}', space=sflag, size = 0x4, scoped, tag = 'scoped memory for tpu_custom_call.1']
    %15 = vsyncpa [#allocation4], 0
    %16 = vsyncpa [#allocation7], 0
    %17 = vsyncpa [#allocation10], 0
    %18 = vsyncpa [#allocation13], 0
    %19 = vsyncpa [#allocation5], 0
    %20 = vsyncpa [#allocation16], 0
    // Predicated region
    $region2: #{tpu_custom_call.1} parent=1 // pred_check
      _
    $region3: #{tpu_custom_call.1} parent=1 // pred_check_branch
      %22 = sbr.rel (0) target = $region5
    $region4: #{tpu_custom_call.1} parent=1 // pred_region
      %24 = vsyncadd [#allocation4], 0
      %s25 = sshll.u32 %s0, 4
      %s26 = int_to_ptr.hbm [resolvable:$true] %s25
      %s27 = sshll.u32 [#allocation3], 4
      %s28 = int_to_ptr.vmem [resolvable:$true] %s27
      %33 = dma.hbm_to_vmem [thread:$0]  %s26, 1024, %s28, [#allocation4], 128, 128, 8
    $region5: #{tpu_custom_call.1} parent=1 // pred_fallthru
      _
    // Predicated region
    $region6: #{tpu_custom_call.1} parent=1 // pred_check
      _
    $region7: #{tpu_custom_call.1} parent=1 // pred_check_branch
      %35 = sbr.rel (0) target = $region9
    $region8: #{tpu_custom_call.1} parent=1 // pred_region
      %37 = vsyncadd [#allocation7], 0
      %s38 = sshll.u32 %s1, 4
      %s39 = int_to_ptr.hbm [resolvable:$true] %s38
      %s40 = sshll.u32 [#allocation6], 4
      %s41 = int_to_ptr.vmem [resolvable:$true] %s40
      %46 = dma.hbm_to_vmem [thread:$0]  %s39, 256, %s41, [#allocation7], 128, 128, 8
    $region9: #{tpu_custom_call.1} parent=1 // pred_fallthru
      _
    // Predicated region
    $region10: #{tpu_custom_call.1} parent=1 // pred_check
      _
    $region11: #{tpu_custom_call.1} parent=1 // pred_check_branch
      %48 = sbr.rel (0) target = $region13
    $region12: #{tpu_custom_call.1} parent=1 // pred_region
      %50 = vsyncadd [#allocation7], 0
      %s51 = sshll.u32 %s2, 4
      %s52 = int_to_ptr.hbm [resolvable:$true] %s51
      %s53 = sshll.u32 [#allocation8], 4
      %s54 = int_to_ptr.vmem [resolvable:$true] %s53
      %59 = dma.hbm_to_vmem [thread:$0]  %s52, 256, %s54, [#allocation7], 128, 128, 8
    $region13: #{tpu_custom_call.1} parent=1 // pred_fallthru
      _
    // Predicated region
    $region14: #{tpu_custom_call.1} parent=1 // pred_check
      _
    $region15: #{tpu_custom_call.1} parent=1 // pred_check_branch
      %61 = sbr.rel (0) target = $region17
    $region16: #{tpu_custom_call.1} parent=1 // pred_region
      %63 = vsyncadd [#allocation10], 0
      %s64 = sshll.u32 %s3, 4
      %s65 = int_to_ptr.hbm [resolvable:$true] %s64
      %s66 = sshll.u32 [#allocation9], 4
      %s67 = int_to_ptr.vmem [resolvable:$true] %s66
      %72 = dma.hbm_to_vmem [thread:$0]  %s65, 512, %s67, [#allocation10], 128, 128, 8
    $region17: #{tpu_custom_call.1} parent=1 // pred_fallthru
      _
    // Predicated region
    $region18: #{tpu_custom_call.1} parent=1 // pred_check
      _
    $region19: #{tpu_custom_call.1} parent=1 // pred_check_branch
      %74 = sbr.rel (0) target = $region21
    $region20: #{tpu_custom_call.1} parent=1 // pred_region
      %76 = vsyncadd [#allocation10], 0
      %s77 = sshll.u32 %s4, 4
      %s78 = int_to_ptr.hbm [resolvable:$true] %s77
      %s79 = sshll.u32 [#allocation11], 4
      %s80 = int_to_ptr.vmem [resolvable:$true] %s79
      %85 = dma.hbm_to_vmem [thread:$0]  %s78, 512, %s80, [#allocation10], 128, 128, 8
    $region21: #{tpu_custom_call.1} parent=1 // pred_fallthru
      _
    // Predicated region
    $region22: #{tpu_custom_call.1} parent=1 // pred_check
      _
    $region23: #{tpu_custom_call.1} parent=1 // pred_check_branch
      %87 = sbr.rel (0) target = $region25
    $region24: #{tpu_custom_call.1} parent=1 // pred_region
      %89 = vsyncadd [#allocation13], 0
      %s90 = sshll.u32 %s5, 4
      %s91 = int_to_ptr.hbm [resolvable:$true] %s90
      %s92 = sshll.u32 [#allocation12], 4
      %s93 = int_to_ptr.vmem [resolvable:$true] %s92
      %98 = dma.hbm_to_vmem [thread:$0]  %s91, 512, %s93, [#allocation13], 128, 128, 8
    $region25: #{tpu_custom_call.1} parent=1 // pred_fallthru
      _
    // Predicated region
    $region26: #{tpu_custom_call.1} parent=1 // pred_check
      _
    $region27: #{tpu_custom_call.1} parent=1 // pred_check_branch
      %100 = sbr.rel (0) target = $region29
    $region28: #{tpu_custom_call.1} parent=1 // pred_region
      _
    $region29: #{tpu_custom_call.1} parent=1 // pred_fallthru
      _
    // Predicated region
    $region30: #{tpu_custom_call.1} parent=1 // pred_check
      _
    $region31: #{tpu_custom_call.1} parent=1 // pred_check_branch
      %102 = sbr.rel (0) target = $region33
    $region32: #{tpu_custom_call.1} parent=1 // pred_region
      %104 = dma.done [#allocation4], 1024
    $region33: #{tpu_custom_call.1} parent=1 // pred_fallthru
      _
    // Predicated region
    $region34: #{tpu_custom_call.1} parent=1 // pred_check
      _
    $region35: #{tpu_custom_call.1} parent=1 // pred_check_branch
      %106 = sbr.rel (0) target = $region37
    $region36: #{tpu_custom_call.1} parent=1 // pred_region
      %108 = dma.done [#allocation7], 256
    $region37: #{tpu_custom_call.1} parent=1 // pred_fallthru
      _
    // Predicated region
    $region38: #{tpu_custom_call.1} parent=1 // pred_check
      _
    $region39: #{tpu_custom_call.1} parent=1 // pred_check_branch
      %110 = sbr.rel (0) target = $region41
    $region40: #{tpu_custom_call.1} parent=1 // pred_region
      %112 = dma.done [#allocation7], 256
    $region41: #{tpu_custom_call.1} parent=1 // pred_fallthru
      _
    // Predicated region
    $region42: #{tpu_custom_call.1} parent=1 // pred_check
      _
    $region43: #{tpu_custom_call.1} parent=1 // pred_check_branch
      %114 = sbr.rel (0) target = $region45
    $region44: #{tpu_custom_call.1} parent=1 // pred_region
      %116 = dma.done [#allocation10], 512
    $region45: #{tpu_custom_call.1} parent=1 // pred_fallthru
      _
    // Predicated region
    $region46: #{tpu_custom_call.1} parent=1 // pred_check
      _
    $region47: #{tpu_custom_call.1} parent=1 // pred_check_branch
      %118 = sbr.rel (0) target = $region49
    $region48: #{tpu_custom_call.1} parent=1 // pred_region
      %120 = dma.done [#allocation10], 512
    $region49: #{tpu_custom_call.1} parent=1 // pred_fallthru
      _
    // Predicated region
    $region50: #{tpu_custom_call.1} parent=1 // pred_check
      _
    $region51: #{tpu_custom_call.1} parent=1 // pred_check_branch
      %122 = sbr.rel (0) target = $region53
    $region52: #{tpu_custom_call.1} parent=1 // pred_region
      %124 = dma.done [#allocation13], 512
    $region53: #{tpu_custom_call.1} parent=1 // pred_fallthru
      _
    %v125 = vld [vmem:[#allocation6] sm:$0xff]
    %v126 = vld [vmem:[#allocation8] sm:$0xff]
    %v127 = vld [vmem:[#allocation9] sm:$0xff]
    %v128 = vld [vmem:[#allocation9 + $0x8] sm:$0xff]
    %v129 = vld [vmem:[#allocation9 + $0x10] sm:$0xff]
    %v130 = vld [vmem:[#allocation9 + $0x18] sm:$0xff]
    %v131 = vld [vmem:[#allocation3] sm:$0xff]
    %vm132 = vcmask 261120
    %v134 = vsel %vm132, %v125, 0
    %136 = vmatpush.msra.mxu0 0.0
    %137 = vmatpush.msra.mxu0 0.0
    %138 = vmatpush.msra.mxu0 0.0
    %139 = vmatpush.msra.mxu0 0.0
    %140 = vmatpush.msra.mxu0 0.0
    %141 = vmatpush.msra.mxu0 0.0
    %142 = vmatpush.msra.mxu0 0.0
    %143 = vmatpush.msra.mxu0 0.0
    %144 = vmatpush.msra.mxu0 0.0
    %145 = vmatpush.msra.mxu0 0.0
    %146 = vmatpush.msra.mxu0 0.0
    %147 = vmatpush.msra.mxu0 0.0
    %148 = vmatpush.msra.mxu0 %v130
    %149 = vmatpush.msra.mxu0 %v129
    %150 = vmatpush.msra.mxu0 %v128
    %151 = vmatpush.msra.mxu0 %v127
    %152 = vmatmul.f32.gmra.mxu0 %v134
    %v153 = vpop.f32.mrf.mxu0
    %v154 = vadd.f32 0.0, %v153
    %155 = vdwg.mxu0
    %v156 = vadd.f32 %v131, %v154
    %v157 = vxor.u32 %v156, 2147483648
    %v158 = vmul.f32 %v157, 1.442695
    %v159 = vpow.pop %v158
    %v160 = vadd.f32 %v159, 1.0
    %v161 = vrcp.pop %v160
    %v162 = vmul.f32 %v160, %v161
    %v163 = vsub.f32 1.0, %v162
    %v164 = vmul.f32 %v161, %v163
    %v165 = vadd.f32 %v161, %v164
    %vm166 = vweird.f32 %v160
    %vm167 = vweird.f32 %v161
    %vm168 = vmor %vm166, %vm167
    %v169 = vsel %vm168, %v161, %v165
    %v170 = vand.u32 2147483647, %v160
    %vm171 = vcmp.eq.f32.partialorder %v170, 8.507059e+37
    %v172 = vand.u32 %v160, 2147483648
    %v173 = vor.u32 1.1754944e-38, %v172
    %v174 = vsel %vm171, %v173, %v169
    %v175 = vmul.f32 1.0, %v174
    %v176 = vtanh.pop %v156
    %178 = vrot.lane.b32.xlu0 %v126, 32
    %v179 = vpop.permute.xlu0 %178
    %v181 = vmul.f32 %v175, %v179
    %183 = vrot.lane.b32.xlu0 %v176, 64
    %v184 = vpop.permute.xlu0 %183
    %v186 = vmul.f32 %v175, %v184
    %188 = vrot.lane.b32.xlu0 %v186, 32
    %v189 = vpop.permute.xlu0 %188
    %v191 = vadd.f32 %v181, %v189
    %v192 = vtanh.pop %v191
    %194 = vrot.lane.b32.xlu0 %v192, 64
    %v195 = vpop.permute.xlu0 %194
    %v197 = vmul.f32 %v175, %v195
    %199 = vrot.lane.b32.xlu0 %v197, 32
    %v200 = vpop.permute.xlu0 %199
    %202 = vst.msk [vmem:[%s7] sm:$0xff] %vm132, %v200
    %s203 = scalar_lea.vmem [#allocation3], 8
    %v204 = vld [vmem:[%s203] sm:$0xff]
    %v205 = vsel %vm132, %v200, 0
    %207 = vmatpush.msra.mxu0 0.0
    %208 = vmatpush.msra.mxu0 0.0
    %209 = vmatpush.msra.mxu0 0.0
    %210 = vmatpush.msra.mxu0 0.0
    %211 = vmatpush.msra.mxu0 0.0
    %212 = vmatpush.msra.mxu0 0.0
    %213 = vmatpush.msra.mxu0 0.0
    %214 = vmatpush.msra.mxu0 0.0
    %215 = vmatpush.msra.mxu0 0.0
    %216 = vmatpush.msra.mxu0 0.0
    %217 = vmatpush.msra.mxu0 0.0
    %218 = vmatpush.msra.mxu0 0.0
    %219 = vmatpush.msra.mxu0 %v130
    %220 = vmatpush.msra.mxu0 %v129
    %221 = vmatpush.msra.mxu0 %v128
    %222 = vmatpush.msra.mxu0 %v127
    %223 = vmatmul.f32.gmra.mxu0 %v205
    %v224 = vpop.f32.mrf.mxu0
    %v225 = vadd.f32 0.0, %v224
    %226 = vdwg.mxu0
    %v227 = vadd.f32 %v204, %v225
    %v228 = vxor.u32 %v227, 2147483648
    %v229 = vmul.f32 %v228, 1.442695
    %v230 = vpow.pop %v229
    %v231 = vadd.f32 %v230, 1.0
    %v232 = vrcp.pop %v231
    %v233 = vmul.f32 %v231, %v232
    %v234 = vsub.f32 1.0, %v233
    %v235 = vmul.f32 %v232, %v234
    %v236 = vadd.f32 %v232, %v235
    %vm237 = vweird.f32 %v231
    %vm238 = vweird.f32 %v232
    %vm239 = vmor %vm237, %vm238
    %v240 = vsel %vm239, %v232, %v236
    %v241 = vand.u32 2147483647, %v231
    %vm242 = vcmp.eq.f32.partialorder %v241, 8.507059e+37
    %v243 = vand.u32 %v231, 2147483648
    %v244 = vor.u32 1.1754944e-38, %v243
    %v245 = vsel %vm242, %v244, %v240
    %v246 = vmul.f32 1.0, %v245
    %v247 = vtanh.pop %v227
    %v248 = vmul.f32 %v246, %v191
    %250 = vrot.lane.b32.xlu0 %v247, 64
    %v251 = vpop.permute.xlu0 %250
    %v253 = vmul.f32 %v246, %v251
    %255 = vrot.lane.b32.xlu0 %v253, 32
    %v256 = vpop.permute.xlu0 %255
    %v258 = vadd.f32 %v248, %v256
    %v259 = vtanh.pop %v258
    %261 = vrot.lane.b32.xlu0 %v259, 64
    %v262 = vpop.permute.xlu0 %261
    %v264 = vmul.f32 %v246, %v262
    %266 = vrot.lane.b32.xlu0 %v264, 32
    %v267 = vpop.permute.xlu0 %266
    %s269 = scalar_lea.vmem %s7, 8
    %270 = vst.msk [vmem:[%s269] sm:$0xff] %vm132, %v267
    %s271 = scalar_lea.vmem [#allocation3], 16
    %v272 = vld [vmem:[%s271] sm:$0xff]
    %v273 = vsel %vm132, %v267, 0
    %275 = vmatpush.msra.mxu0 0.0
    %276 = vmatpush.msra.mxu0 0.0
    %277 = vmatpush.msra.mxu0 0.0
    %278 = vmatpush.msra.mxu0 0.0
    %279 = vmatpush.msra.mxu0 0.0
    %280 = vmatpush.msra.mxu0 0.0
    %281 = vmatpush.msra.mxu0 0.0
    %282 = vmatpush.msra.mxu0 0.0
    %283 = vmatpush.msra.mxu0 0.0
    %284 = vmatpush.msra.mxu0 0.0
    %285 = vmatpush.msra.mxu0 0.0
    %286 = vmatpush.msra.mxu0 0.0
    %287 = vmatpush.msra.mxu0 %v130
    %288 = vmatpush.msra.mxu0 %v129
    %289 = vmatpush.msra.mxu0 %v128
    %290 = vmatpush.msra.mxu0 %v127
    %291 = vmatmul.f32.gmra.mxu0 %v273
    %v292 = vpop.f32.mrf.mxu0
    %v293 = vadd.f32 0.0, %v292
    %294 = vdwg.mxu0
    %v295 = vadd.f32 %v272, %v293
    %v296 = vxor.u32 %v295, 2147483648
    %v297 = vmul.f32 %v296, 1.442695
    %v298 = vpow.pop %v297
    %v299 = vadd.f32 %v298, 1.0
    %v300 = vrcp.pop %v299
    %v301 = vmul.f32 %v299, %v300
    %v302 = vsub.f32 1.0, %v301
    %v303 = vmul.f32 %v300, %v302
    %v304 = vadd.f32 %v300, %v303
    %vm305 = vweird.f32 %v299
    %vm306 = vweird.f32 %v300
    %vm307 = vmor %vm305, %vm306
    %v308 = vsel %vm307, %v300, %v304
    %v309 = vand.u32 2147483647, %v299
    %vm310 = vcmp.eq.f32.partialorder %v309, 8.507059e+37
    %v311 = vand.u32 %v299, 2147483648
    %v312 = vor.u32 1.1754944e-38, %v311
    %v313 = vsel %vm310, %v312, %v308
    %v314 = vmul.f32 1.0, %v313
    %v315 = vtanh.pop %v295
    %v316 = vmul.f32 %v314, %v258
    %318 = vrot.lane.b32.xlu0 %v315, 64
    %v319 = vpop.permute.xlu0 %318
    %v321 = vmul.f32 %v314, %v319
    %323 = vrot.lane.b32.xlu0 %v321, 32
    %v324 = vpop.permute.xlu0 %323
    %v326 = vadd.f32 %v316, %v324
    %v327 = vtanh.pop %v326
    %329 = vrot.lane.b32.xlu0 %v327, 64
    %v330 = vpop.permute.xlu0 %329
    %v332 = vmul.f32 %v314, %v330
    %334 = vrot.lane.b32.xlu0 %v332, 32
    %v335 = vpop.permute.xlu0 %334
    %s337 = scalar_lea.vmem %s7, 16
    %338 = vst.msk [vmem:[%s337] sm:$0xff] %vm132, %v335
    %s339 = scalar_lea.vmem [#allocation3], 24
    %v340 = vld [vmem:[%s339] sm:$0xff]
    %v341 = vsel %vm132, %v335, 0
    %343 = vmatpush.msra.mxu0 0.0
    %344 = vmatpush.msra.mxu0 0.0
    %345 = vmatpush.msra.mxu0 0.0
    %346 = vmatpush.msra.mxu0 0.0
    %347 = vmatpush.msra.mxu0 0.0
    %348 = vmatpush.msra.mxu0 0.0
    %349 = vmatpush.msra.mxu0 0.0
    %350 = vmatpush.msra.mxu0 0.0
    %351 = vmatpush.msra.mxu0 0.0
    %352 = vmatpush.msra.mxu0 0.0
    %353 = vmatpush.msra.mxu0 0.0
    %354 = vmatpush.msra.mxu0 0.0
    %355 = vmatpush.msra.mxu0 %v130
    %356 = vmatpush.msra.mxu0 %v129
    %357 = vmatpush.msra.mxu0 %v128
    %358 = vmatpush.msra.mxu0 %v127
    %359 = vmatmul.f32.gmra.mxu0 %v341
    %v360 = vpop.f32.mrf.mxu0
    %v361 = vadd.f32 0.0, %v360
    %362 = vdwg.mxu0
    %v363 = vadd.f32 %v340, %v361
    %v364 = vxor.u32 %v363, 2147483648
    %v365 = vmul.f32 %v364, 1.442695
    %v366 = vpow.pop %v365
    %v367 = vadd.f32 %v366, 1.0
    %v368 = vrcp.pop %v367
    %v369 = vmul.f32 %v367, %v368
    %v370 = vsub.f32 1.0, %v369
    %v371 = vmul.f32 %v368, %v370
    %v372 = vadd.f32 %v368, %v371
    %vm373 = vweird.f32 %v367
    %vm374 = vweird.f32 %v368
    %vm375 = vmor %vm373, %vm374
    %v376 = vsel %vm375, %v368, %v372
    %v377 = vand.u32 2147483647, %v367
    %vm378 = vcmp.eq.f32.partialorder %v377, 8.507059e+37
    %v379 = vand.u32 %v367, 2147483648
    %v380 = vor.u32 1.1754944e-38, %v379
    %v381 = vsel %vm378, %v380, %v376
    %v382 = vmul.f32 1.0, %v381
    %v383 = vtanh.pop %v363
    %v384 = vmul.f32 %v382, %v326
    %386 = vrot.lane.b32.xlu0 %v383, 64
    %v387 = vpop.permute.xlu0 %386
    %v389 = vmul.f32 %v382, %v387
    %391 = vrot.lane.b32.xlu0 %v389, 32
    %v392 = vpop.permute.xlu0 %391
    %v394 = vadd.f32 %v384, %v392
    %v395 = vtanh.pop %v394
    %397 = vrot.lane.b32.xlu0 %v395, 64
    %v398 = vpop.permute.xlu0 %397
    %v400 = vmul.f32 %v382, %v398
    %402 = vrot.lane.b32.xlu0 %v400, 32
    %v403 = vpop.permute.xlu0 %402
    %s405 = scalar_lea.vmem %s7, 24
    %406 = vst.msk [vmem:[%s405] sm:$0xff] %vm132, %v403
    %s407 = scalar_lea.vmem [#allocation3], 32
    %v408 = vld [vmem:[%s407] sm:$0xff]
    %v409 = vsel %vm132, %v403, 0
    %411 = vmatpush.msra.mxu0 0.0
    %412 = vmatpush.msra.mxu0 0.0
    %413 = vmatpush.msra.mxu0 0.0
    %414 = vmatpush.msra.mxu0 0.0
    %415 = vmatpush.msra.mxu0 0.0
    %416 = vmatpush.msra.mxu0 0.0
    %417 = vmatpush.msra.mxu0 0.0
    %418 = vmatpush.msra.mxu0 0.0
    %419 = vmatpush.msra.mxu0 0.0
    %420 = vmatpush.msra.mxu0 0.0
    %421 = vmatpush.msra.mxu0 0.0
    %422 = vmatpush.msra.mxu0 0.0
    %423 = vmatpush.msra.mxu0 %v130
    %424 = vmatpush.msra.mxu0 %v129
    %425 = vmatpush.msra.mxu0 %v128
    %426 = vmatpush.msra.mxu0 %v127
    %427 = vmatmul.f32.gmra.mxu0 %v409
    %v428 = vpop.f32.mrf.mxu0
    %v429 = vadd.f32 0.0, %v428
    %430 = vdwg.mxu0
    %v431 = vadd.f32 %v408, %v429
    %v432 = vxor.u32 %v431, 2147483648
    %v433 = vmul.f32 %v432, 1.442695
    %v434 = vpow.pop %v433
    %v435 = vadd.f32 %v434, 1.0
    %v436 = vrcp.pop %v435
    %v437 = vmul.f32 %v435, %v436
    %v438 = vsub.f32 1.0, %v437
    %v439 = vmul.f32 %v436, %v438
    %v440 = vadd.f32 %v436, %v439
    %vm441 = vweird.f32 %v435
    %vm442 = vweird.f32 %v436
    %vm443 = vmor %vm441, %vm442
    %v444 = vsel %vm443, %v436, %v440
    %v445 = vand.u32 2147483647, %v435
    %vm446 = vcmp.eq.f32.partialorder %v445, 8.507059e+37
    %v447 = vand.u32 %v435, 2147483648
    %v448 = vor.u32 1.1754944e-38, %v447
    %v449 = vsel %vm446, %v448, %v444
    %v450 = vmul.f32 1.0, %v449
    %v451 = vtanh.pop %v431
    %v452 = vmul.f32 %v450, %v394
    %454 = vrot.lane.b32.xlu0 %v451, 64
    %v455 = vpop.permute.xlu0 %454
    %v457 = vmul.f32 %v450, %v455
    %459 = vrot.lane.b32.xlu0 %v457, 32
    %v460 = vpop.permute.xlu0 %459
    %v462 = vadd.f32 %v452, %v460
    %v463 = vtanh.pop %v462
    %465 = vrot.lane.b32.xlu0 %v463, 64
    %v466 = vpop.permute.xlu0 %465
    %v468 = vmul.f32 %v450, %v466
    %470 = vrot.lane.b32.xlu0 %v468, 32
    %v471 = vpop.permute.xlu0 %470
    %s473 = scalar_lea.vmem %s7, 32
    %474 = vst.msk [vmem:[%s473] sm:$0xff] %vm132, %v471
    %s475 = scalar_lea.vmem [#allocation3], 40
    %v476 = vld [vmem:[%s475] sm:$0xff]
    %v477 = vsel %vm132, %v471, 0
    %479 = vmatpush.msra.mxu0 0.0
    %480 = vmatpush.msra.mxu0 0.0
    %481 = vmatpush.msra.mxu0 0.0
    %482 = vmatpush.msra.mxu0 0.0
    %483 = vmatpush.msra.mxu0 0.0
    %484 = vmatpush.msra.mxu0 0.0
    %485 = vmatpush.msra.mxu0 0.0
    %486 = vmatpush.msra.mxu0 0.0
    %487 = vmatpush.msra.mxu0 0.0
    %488 = vmatpush.msra.mxu0 0.0
    %489 = vmatpush.msra.mxu0 0.0
    %490 = vmatpush.msra.mxu0 0.0
    %491 = vmatpush.msra.mxu0 %v130
    %492 = vmatpush.msra.mxu0 %v129
    %493 = vmatpush.msra.mxu0 %v128
    %494 = vmatpush.msra.mxu0 %v127
    %495 = vmatmul.f32.gmra.mxu0 %v477
    %v496 = vpop.f32.mrf.mxu0
    %v497 = vadd.f32 0.0, %v496
    %498 = vdwg.mxu0
    %v499 = vadd.f32 %v476, %v497
    %v500 = vxor.u32 %v499, 2147483648
    %v501 = vmul.f32 %v500, 1.442695
    %v502 = vpow.pop %v501
    %v503 = vadd.f32 %v502, 1.0
    %v504 = vrcp.pop %v503
    %v505 = vmul.f32 %v503, %v504
    %v506 = vsub.f32 1.0, %v505
    %v507 = vmul.f32 %v504, %v506
    %v508 = vadd.f32 %v504, %v507
    %vm509 = vweird.f32 %v503
    %vm510 = vweird.f32 %v504
    %vm511 = vmor %vm509, %vm510
    %v512 = vsel %vm511, %v504, %v508
    %v513 = vand.u32 2147483647, %v503
    %vm514 = vcmp.eq.f32.partialorder %v513, 8.507059e+37
    %v515 = vand.u32 %v503, 2147483648
    %v516 = vor.u32 1.1754944e-38, %v515
    %v517 = vsel %vm514, %v516, %v512
    %v518 = vmul.f32 1.0, %v517
    %v519 = vtanh.pop %v499
    %v520 = vmul.f32 %v518, %v462
    %522 = vrot.lane.b32.xlu0 %v519, 64
    %v523 = vpop.permute.xlu0 %522
    %v525 = vmul.f32 %v518, %v523
    %527 = vrot.lane.b32.xlu0 %v525, 32
    %v528 = vpop.permute.xlu0 %527
    %v530 = vadd.f32 %v520, %v528
    %v531 = vtanh.pop %v530
    %533 = vrot.lane.b32.xlu0 %v531, 64
    %v534 = vpop.permute.xlu0 %533
    %v536 = vmul.f32 %v518, %v534
    %538 = vrot.lane.b32.xlu0 %v536, 32
    %v539 = vpop.permute.xlu0 %538
    %s541 = scalar_lea.vmem %s7, 40
    %542 = vst.msk [vmem:[%s541] sm:$0xff] %vm132, %v539
    %s543 = scalar_lea.vmem [#allocation3], 48
    %v544 = vld [vmem:[%s543] sm:$0xff]
    %v545 = vsel %vm132, %v539, 0
    %547 = vmatpush.msra.mxu0 0.0
    %548 = vmatpush.msra.mxu0 0.0
    %549 = vmatpush.msra.mxu0 0.0
    %550 = vmatpush.msra.mxu0 0.0
    %551 = vmatpush.msra.mxu0 0.0
    %552 = vmatpush.msra.mxu0 0.0
    %553 = vmatpush.msra.mxu0 0.0
    %554 = vmatpush.msra.mxu0 0.0
    %555 = vmatpush.msra.mxu0 0.0
    %556 = vmatpush.msra.mxu0 0.0
    %557 = vmatpush.msra.mxu0 0.0
    %558 = vmatpush.msra.mxu0 0.0
    %559 = vmatpush.msra.mxu0 %v130
    %560 = vmatpush.msra.mxu0 %v129
    %561 = vmatpush.msra.mxu0 %v128
    %562 = vmatpush.msra.mxu0 %v127
    %563 = vmatmul.f32.gmra.mxu0 %v545
    %v564 = vpop.f32.mrf.mxu0
    %v565 = vadd.f32 0.0, %v564
    %566 = vdwg.mxu0
    %v567 = vadd.f32 %v544, %v565
    %v568 = vxor.u32 %v567, 2147483648
    %v569 = vmul.f32 %v568, 1.442695
    %v570 = vpow.pop %v569
    %v571 = vadd.f32 %v570, 1.0
    %v572 = vrcp.pop %v571
    %v573 = vmul.f32 %v571, %v572
    %v574 = vsub.f32 1.0, %v573
    %v575 = vmul.f32 %v572, %v574
    %v576 = vadd.f32 %v572, %v575
    %vm577 = vweird.f32 %v571
    %vm578 = vweird.f32 %v572
    %vm579 = vmor %vm577, %vm578
    %v580 = vsel %vm579, %v572, %v576
    %v581 = vand.u32 2147483647, %v571
    %vm582 = vcmp.eq.f32.partialorder %v581, 8.507059e+37
    %v583 = vand.u32 %v571, 2147483648
    %v584 = vor.u32 1.1754944e-38, %v583
    %v585 = vsel %vm582, %v584, %v580
    %v586 = vmul.f32 1.0, %v585
    %v587 = vtanh.pop %v567
    %v588 = vmul.f32 %v586, %v530
    %590 = vrot.lane.b32.xlu0 %v587, 64
    %v591 = vpop.permute.xlu0 %590
    %v593 = vmul.f32 %v586, %v591
    %595 = vrot.lane.b32.xlu0 %v593, 32
    %v596 = vpop.permute.xlu0 %595
    %v598 = vadd.f32 %v588, %v596
    %v599 = vtanh.pop %v598
    %601 = vrot.lane.b32.xlu0 %v599, 64
    %v602 = vpop.permute.xlu0 %601
    %v604 = vmul.f32 %v586, %v602
    %606 = vrot.lane.b32.xlu0 %v604, 32
    %v607 = vpop.permute.xlu0 %606
    %s609 = scalar_lea.vmem %s7, 48
    %610 = vst.msk [vmem:[%s609] sm:$0xff] %vm132, %v607
    %s611 = scalar_lea.vmem [#allocation3], 56
    %v612 = vld [vmem:[%s611] sm:$0xff]
    %v613 = vsel %vm132, %v607, 0
    %615 = vmatpush.msra.mxu0 0.0
    %616 = vmatpush.msra.mxu0 0.0
    %617 = vmatpush.msra.mxu0 0.0
    %618 = vmatpush.msra.mxu0 0.0
    %619 = vmatpush.msra.mxu0 0.0
    %620 = vmatpush.msra.mxu0 0.0
    %621 = vmatpush.msra.mxu0 0.0
    %622 = vmatpush.msra.mxu0 0.0
    %623 = vmatpush.msra.mxu0 0.0
    %624 = vmatpush.msra.mxu0 0.0
    %625 = vmatpush.msra.mxu0 0.0
    %626 = vmatpush.msra.mxu0 0.0
    %627 = vmatpush.msra.mxu0 %v130
    %628 = vmatpush.msra.mxu0 %v129
    %629 = vmatpush.msra.mxu0 %v128
    %630 = vmatpush.msra.mxu0 %v127
    %631 = vmatmul.f32.gmra.mxu0 %v613
    %v632 = vpop.f32.mrf.mxu0
    %v633 = vadd.f32 0.0, %v632
    %634 = vdwg.mxu0
    %v635 = vadd.f32 %v612, %v633
    %v636 = vxor.u32 %v635, 2147483648
    %v637 = vmul.f32 %v636, 1.442695
    %v638 = vpow.pop %v637
    %v639 = vadd.f32 %v638, 1.0
    %v640 = vrcp.pop %v639
    %v641 = vmul.f32 %v639, %v640
    %v642 = vsub.f32 1.0, %v641
    %v643 = vmul.f32 %v640, %v642
    %v644 = vadd.f32 %v640, %v643
    %vm645 = vweird.f32 %v639
    %vm646 = vweird.f32 %v640
    %vm647 = vmor %vm645, %vm646
    %v648 = vsel %vm647, %v640, %v644
    %v649 = vand.u32 2147483647, %v639
    %vm650 = vcmp.eq.f32.partialorder %v649, 8.507059e+37
    %v651 = vand.u32 %v639, 2147483648
    %v652 = vor.u32 1.1754944e-38, %v651
    %v653 = vsel %vm650, %v652, %v648
    %v654 = vmul.f32 1.0, %v653
    %v655 = vtanh.pop %v635
    %v656 = vmul.f32 %v654, %v598
    %658 = vrot.lane.b32.xlu0 %v655, 64
    %v659 = vpop.permute.xlu0 %658
    %v661 = vmul.f32 %v654, %v659
    %663 = vrot.lane.b32.xlu0 %v661, 32
    %v664 = vpop.permute.xlu0 %663
    %v666 = vadd.f32 %v656, %v664
    %v667 = vtanh.pop %v666
    %669 = vrot.lane.b32.xlu0 %v667, 64
    %v670 = vpop.permute.xlu0 %669
    %v672 = vmul.f32 %v654, %v670
    %674 = vrot.lane.b32.xlu0 %v672, 32
    %v675 = vpop.permute.xlu0 %674
    %s677 = scalar_lea.vmem %s7, 56
    %678 = vst.msk [vmem:[%s677] sm:$0xff] %vm132, %v675
    %679 = vst.msk [vmem:[#allocation14] sm:$0xff] %vm132, %v675
    %681 = vrot.lane.b32.xlu0 %v666, 96
    %v682 = vpop.permute.xlu0 %681
    %684 = vst.msk [vmem:[#allocation15] sm:$0xff] %vm132, %v682
    %v685 = vld [vmem:[%s7] sm:$0xff]
    %v686 = vld [vmem:[%s7 + $0x8] sm:$0xff]
    %v687 = vld [vmem:[%s7 + $0x10] sm:$0xff]
    %v688 = vld [vmem:[%s7 + $0x18] sm:$0xff]
    %v689 = vld [vmem:[%s7 + $0x20] sm:$0xff]
    %v690 = vld [vmem:[%s7 + $0x28] sm:$0xff]
    %v691 = vld [vmem:[%s7 + $0x30] sm:$0xff]
    %v692 = vld [vmem:[%s7 + $0x38] sm:$0xff]
    %v693 = vld [vmem:[#allocation11] sm:$0xff]
    %v694 = vld [vmem:[#allocation11 + $0x8] sm:$0xff]
    %v695 = vld [vmem:[#allocation11 + $0x10] sm:$0xff]
    %v696 = vld [vmem:[#allocation11 + $0x18] sm:$0xff]
    %v697 = vld [vmem:[%s6] sm:$0x1]
    %v699 = vperm.slane %v697, 0
    %v702 = vsel %vm132, %v685, 0
    %v705 = vsel %vm132, %v686, 0
    %v708 = vsel %vm132, %v687, 0
    %v711 = vsel %vm132, %v688, 0
    %v714 = vsel %vm132, %v689, 0
    %v717 = vsel %vm132, %v690, 0
    %v720 = vsel %vm132, %v691, 0
    %v723 = vsel %vm132, %v692, 0
    %725 = vmatpush.msra.mxu0 0.0
    %726 = vmatpush.msra.mxu0 0.0
    %727 = vmatpush.msra.mxu0 0.0
    %728 = vmatpush.msra.mxu0 0.0
    %729 = vmatpush.msra.mxu0 0.0
    %730 = vmatpush.msra.mxu0 0.0
    %731 = vmatpush.msra.mxu0 0.0
    %732 = vmatpush.msra.mxu0 0.0
    %733 = vmatpush.msra.mxu0 0.0
    %734 = vmatpush.msra.mxu0 0.0
    %735 = vmatpush.msra.mxu0 0.0
    %736 = vmatpush.msra.mxu0 0.0
    %737 = vmatpush.msra.mxu0 %v696
    %738 = vmatpush.msra.mxu0 %v695
    %739 = vmatpush.msra.mxu0 %v694
    %740 = vmatpush.msra.mxu0 %v693
    %741 = vmatmul.f32.gmra.mxu0 %v702
    %v742 = vpop.f32.mrf.mxu0
    %v743 = vadd.f32 %v699, %v742
    %744 = vmatmul.f32.gmra.mxu0 %v705
    %v745 = vpop.f32.mrf.mxu0
    %v746 = vadd.f32 %v699, %v745
    %747 = vmatmul.f32.gmra.mxu0 %v708
    %v748 = vpop.f32.mrf.mxu0
    %v749 = vadd.f32 %v699, %v748
    %750 = vmatmul.f32.gmra.mxu0 %v711
    %v751 = vpop.f32.mrf.mxu0
    %v752 = vadd.f32 %v699, %v751
    %753 = vmatmul.f32.gmra.mxu0 %v714
    %v754 = vpop.f32.mrf.mxu0
    %v755 = vadd.f32 %v699, %v754
    %756 = vmatmul.f32.gmra.mxu0 %v717
    %v757 = vpop.f32.mrf.mxu0
    %v758 = vadd.f32 %v699, %v757
    %759 = vmatmul.f32.gmra.mxu0 %v720
    %v760 = vpop.f32.mrf.mxu0
    %v761 = vadd.f32 %v699, %v760
    %762 = vmatmul.f32.gmra.mxu0 %v723
    %v763 = vpop.f32.mrf.mxu0
    %v764 = vadd.f32 %v699, %v763
    %765 = vdwg.mxu0
    %766 = vst [vmem:[#allocation2] sm:$0xff] %v743
    %767 = vst [vmem:[#allocation2 + $0x8] sm:$0xff] %v746
    %768 = vst [vmem:[#allocation2 + $0x10] sm:$0xff] %v749
    %769 = vst [vmem:[#allocation2 + $0x18] sm:$0xff] %v752
    %770 = vst [vmem:[#allocation2 + $0x20] sm:$0xff] %v755
    %771 = vst [vmem:[#allocation2 + $0x28] sm:$0xff] %v758
    %772 = vst [vmem:[#allocation2 + $0x30] sm:$0xff] %v761
    %773 = vst [vmem:[#allocation2 + $0x38] sm:$0xff] %v764
    %s774 = scalar_lea.vmem [#allocation6], 8
    %v775 = vld [vmem:[%s774] sm:$0xff]
    %s776 = scalar_lea.vmem [#allocation8], 8
    %v777 = vld [vmem:[%s776] sm:$0xff]
    %v778 = vld [vmem:[#allocation12] sm:$0xff]
    %v779 = vld [vmem:[#allocation12 + $0x8] sm:$0xff]
    %v780 = vld [vmem:[#allocation12 + $0x10] sm:$0xff]
    %v781 = vld [vmem:[#allocation12 + $0x18] sm:$0xff]
    %v782 = vld [vmem:[#allocation2] sm:$0xff]
    %v784 = vsel %vm132, %v775, 0
    %786 = vmatpush.msra.mxu0 0.0
    %787 = vmatpush.msra.mxu0 0.0
    %788 = vmatpush.msra.mxu0 0.0
    %789 = vmatpush.msra.mxu0 0.0
    %790 = vmatpush.msra.mxu0 0.0
    %791 = vmatpush.msra.mxu0 0.0
    %792 = vmatpush.msra.mxu0 0.0
    %793 = vmatpush.msra.mxu0 0.0
    %794 = vmatpush.msra.mxu0 0.0
    %795 = vmatpush.msra.mxu0 0.0
    %796 = vmatpush.msra.mxu0 0.0
    %797 = vmatpush.msra.mxu0 0.0
    %798 = vmatpush.msra.mxu0 %v781
    %799 = vmatpush.msra.mxu0 %v780
    %800 = vmatpush.msra.mxu0 %v779
    %801 = vmatpush.msra.mxu0 %v778
    %802 = vmatmul.f32.gmra.mxu0 %v784
    %v803 = vpop.f32.mrf.mxu0
    %v804 = vadd.f32 0.0, %v803
    %805 = vdwg.mxu0
    %v806 = vadd.f32 %v782, %v804
    %v807 = vxor.u32 %v806, 2147483648
    %v808 = vmul.f32 %v807, 1.442695
    %v809 = vpow.pop %v808
    %v810 = vadd.f32 %v809, 1.0
    %v811 = vrcp.pop %v810
    %v812 = vmul.f32 %v810, %v811
    %v813 = vsub.f32 1.0, %v812
    %v814 = vmul.f32 %v811, %v813
    %v815 = vadd.f32 %v811, %v814
    %vm816 = vweird.f32 %v810
    %vm817 = vweird.f32 %v811
    %vm818 = vmor %vm816, %vm817
    %v819 = vsel %vm818, %v811, %v815
    %v820 = vand.u32 2147483647, %v810
    %vm821 = vcmp.eq.f32.partialorder %v820, 8.507059e+37
    %v822 = vand.u32 %v810, 2147483648
    %v823 = vor.u32 1.1754944e-38, %v822
    %v824 = vsel %vm821, %v823, %v819
    %v825 = vmul.f32 1.0, %v824
    %v826 = vtanh.pop %v806
    %828 = vrot.lane.b32.xlu0 %v777, 32
    %v829 = vpop.permute.xlu0 %828
    %v831 = vmul.f32 %v825, %v829
    %833 = vrot.lane.b32.xlu0 %v826, 64
    %v834 = vpop.permute.xlu0 %833
    %v836 = vmul.f32 %v825, %v834
    %838 = vrot.lane.b32.xlu0 %v836, 32
    %v839 = vpop.permute.xlu0 %838
    %v841 = vadd.f32 %v831, %v839
    %v842 = vtanh.pop %v841
    %844 = vrot.lane.b32.xlu0 %v842, 64
    %v845 = vpop.permute.xlu0 %844
    %v847 = vmul.f32 %v825, %v845
    %849 = vrot.lane.b32.xlu0 %v847, 32
    %v850 = vpop.permute.xlu0 %849
    %852 = vst.msk [vmem:[%s7] sm:$0xff] %vm132, %v850
    %s853 = scalar_lea.vmem [#allocation2], 8
    %v854 = vld [vmem:[%s853] sm:$0xff]
    %v855 = vsel %vm132, %v850, 0
    %857 = vmatpush.msra.mxu0 0.0
    %858 = vmatpush.msra.mxu0 0.0
    %859 = vmatpush.msra.mxu0 0.0
    %860 = vmatpush.msra.mxu0 0.0
    %861 = vmatpush.msra.mxu0 0.0
    %862 = vmatpush.msra.mxu0 0.0
    %863 = vmatpush.msra.mxu0 0.0
    %864 = vmatpush.msra.mxu0 0.0
    %865 = vmatpush.msra.mxu0 0.0
    %866 = vmatpush.msra.mxu0 0.0
    %867 = vmatpush.msra.mxu0 0.0
    %868 = vmatpush.msra.mxu0 0.0
    %869 = vmatpush.msra.mxu0 %v781
    %870 = vmatpush.msra.mxu0 %v780
    %871 = vmatpush.msra.mxu0 %v779
    %872 = vmatpush.msra.mxu0 %v778
    %873 = vmatmul.f32.gmra.mxu0 %v855
    %v874 = vpop.f32.mrf.mxu0
    %v875 = vadd.f32 0.0, %v874
    %876 = vdwg.mxu0
    %v877 = vadd.f32 %v854, %v875
    %v878 = vxor.u32 %v877, 2147483648
    %v879 = vmul.f32 %v878, 1.442695
    %v880 = vpow.pop %v879
    %v881 = vadd.f32 %v880, 1.0
    %v882 = vrcp.pop %v881
    %v883 = vmul.f32 %v881, %v882
    %v884 = vsub.f32 1.0, %v883
    %v885 = vmul.f32 %v882, %v884
    %v886 = vadd.f32 %v882, %v885
    %vm887 = vweird.f32 %v881
    %vm888 = vweird.f32 %v882
    %vm889 = vmor %vm887, %vm888
    %v890 = vsel %vm889, %v882, %v886
    %v891 = vand.u32 2147483647, %v881
    %vm892 = vcmp.eq.f32.partialorder %v891, 8.507059e+37
    %v893 = vand.u32 %v881, 2147483648
    %v894 = vor.u32 1.1754944e-38, %v893
    %v895 = vsel %vm892, %v894, %v890
    %v896 = vmul.f32 1.0, %v895
    %v897 = vtanh.pop %v877
    %v898 = vmul.f32 %v896, %v841
    %900 = vrot.lane.b32.xlu0 %v897, 64
    %v901 = vpop.permute.xlu0 %900
    %v903 = vmul.f32 %v896, %v901
    %905 = vrot.lane.b32.xlu0 %v903, 32
    %v906 = vpop.permute.xlu0 %905
    %v908 = vadd.f32 %v898, %v906
    %v909 = vtanh.pop %v908
    %911 = vrot.lane.b32.xlu0 %v909, 64
    %v912 = vpop.permute.xlu0 %911
    %v914 = vmul.f32 %v896, %v912
    %916 = vrot.lane.b32.xlu0 %v914, 32
    %v917 = vpop.permute.xlu0 %916
    %919 = vst.msk [vmem:[%s269] sm:$0xff] %vm132, %v917
    %s920 = scalar_lea.vmem [#allocation2], 16
    %v921 = vld [vmem:[%s920] sm:$0xff]
    %v922 = vsel %vm132, %v917, 0
    %924 = vmatpush.msra.mxu0 0.0
    %925 = vmatpush.msra.mxu0 0.0
    %926 = vmatpush.msra.mxu0 0.0
    %927 = vmatpush.msra.mxu0 0.0
    %928 = vmatpush.msra.mxu0 0.0
    %929 = vmatpush.msra.mxu0 0.0
    %930 = vmatpush.msra.mxu0 0.0
    %931 = vmatpush.msra.mxu0 0.0
    %932 = vmatpush.msra.mxu0 0.0
    %933 = vmatpush.msra.mxu0 0.0
    %934 = vmatpush.msra.mxu0 0.0
    %935 = vmatpush.msra.mxu0 0.0
    %936 = vmatpush.msra.mxu0 %v781
    %937 = vmatpush.msra.mxu0 %v780
    %938 = vmatpush.msra.mxu0 %v779
    %939 = vmatpush.msra.mxu0 %v778
    %940 = vmatmul.f32.gmra.mxu0 %v922
    %v941 = vpop.f32.mrf.mxu0
    %v942 = vadd.f32 0.0, %v941
    %943 = vdwg.mxu0
    %v944 = vadd.f32 %v921, %v942
    %v945 = vxor.u32 %v944, 2147483648
    %v946 = vmul.f32 %v945, 1.442695
    %v947 = vpow.pop %v946
    %v948 = vadd.f32 %v947, 1.0
    %v949 = vrcp.pop %v948
    %v950 = vmul.f32 %v948, %v949
    %v951 = vsub.f32 1.0, %v950
    %v952 = vmul.f32 %v949, %v951
    %v953 = vadd.f32 %v949, %v952
    %vm954 = vweird.f32 %v948
    %vm955 = vweird.f32 %v949
    %vm956 = vmor %vm954, %vm955
    %v957 = vsel %vm956, %v949, %v953
    %v958 = vand.u32 2147483647, %v948
    %vm959 = vcmp.eq.f32.partialorder %v958, 8.507059e+37
    %v960 = vand.u32 %v948, 2147483648
    %v961 = vor.u32 1.1754944e-38, %v960
    %v962 = vsel %vm959, %v961, %v957
    %v963 = vmul.f32 1.0, %v962
    %v964 = vtanh.pop %v944
    %v965 = vmul.f32 %v963, %v908
    %967 = vrot.lane.b32.xlu0 %v964, 64
    %v968 = vpop.permute.xlu0 %967
    %v970 = vmul.f32 %v963, %v968
    %972 = vrot.lane.b32.xlu0 %v970, 32
    %v973 = vpop.permute.xlu0 %972
    %v975 = vadd.f32 %v965, %v973
    %v976 = vtanh.pop %v975
    %978 = vrot.lane.b32.xlu0 %v976, 64
    %v979 = vpop.permute.xlu0 %978
    %v981 = vmul.f32 %v963, %v979
    %983 = vrot.lane.b32.xlu0 %v981, 32
    %v984 = vpop.permute.xlu0 %983
    %986 = vst.msk [vmem:[%s337] sm:$0xff] %vm132, %v984
    %s987 = scalar_lea.vmem [#allocation2], 24
    %v988 = vld [vmem:[%s987] sm:$0xff]
    %v989 = vsel %vm132, %v984, 0
    %991 = vmatpush.msra.mxu0 0.0
    %992 = vmatpush.msra.mxu0 0.0
    %993 = vmatpush.msra.mxu0 0.0
    %994 = vmatpush.msra.mxu0 0.0
    %995 = vmatpush.msra.mxu0 0.0
    %996 = vmatpush.msra.mxu0 0.0
    %997 = vmatpush.msra.mxu0 0.0
    %998 = vmatpush.msra.mxu0 0.0
    %999 = vmatpush.msra.mxu0 0.0
    %1000 = vmatpush.msra.mxu0 0.0
    %1001 = vmatpush.msra.mxu0 0.0
    %1002 = vmatpush.msra.mxu0 0.0
    %1003 = vmatpush.msra.mxu0 %v781
    %1004 = vmatpush.msra.mxu0 %v780
    %1005 = vmatpush.msra.mxu0 %v779
    %1006 = vmatpush.msra.mxu0 %v778
    %1007 = vmatmul.f32.gmra.mxu0 %v989
    %v1008 = vpop.f32.mrf.mxu0
    %v1009 = vadd.f32 0.0, %v1008
    %1010 = vdwg.mxu0
    %v1011 = vadd.f32 %v988, %v1009
    %v1012 = vxor.u32 %v1011, 2147483648
    %v1013 = vmul.f32 %v1012, 1.442695
    %v1014 = vpow.pop %v1013
    %v1015 = vadd.f32 %v1014, 1.0
    %v1016 = vrcp.pop %v1015
    %v1017 = vmul.f32 %v1015, %v1016
    %v1018 = vsub.f32 1.0, %v1017
    %v1019 = vmul.f32 %v1016, %v1018
    %v1020 = vadd.f32 %v1016, %v1019
    %vm1021 = vweird.f32 %v1015
    %vm1022 = vweird.f32 %v1016
    %vm1023 = vmor %vm1021, %vm1022
    %v1024 = vsel %vm1023, %v1016, %v1020
    %v1025 = vand.u32 2147483647, %v1015
    %vm1026 = vcmp.eq.f32.partialorder %v1025, 8.507059e+37
    %v1027 = vand.u32 %v1015, 2147483648
    %v1028 = vor.u32 1.1754944e-38, %v1027
    %v1029 = vsel %vm1026, %v1028, %v1024
    %v1030 = vmul.f32 1.0, %v1029
    %v1031 = vtanh.pop %v1011
    %v1032 = vmul.f32 %v1030, %v975
    %1034 = vrot.lane.b32.xlu0 %v1031, 64
    %v1035 = vpop.permute.xlu0 %1034
    %v1037 = vmul.f32 %v1030, %v1035
    %1039 = vrot.lane.b32.xlu0 %v1037, 32
    %v1040 = vpop.permute.xlu0 %1039
    %v1042 = vadd.f32 %v1032, %v1040
    %v1043 = vtanh.pop %v1042
    %1045 = vrot.lane.b32.xlu0 %v1043, 64
    %v1046 = vpop.permute.xlu0 %1045
    %v1048 = vmul.f32 %v1030, %v1046
    %1050 = vrot.lane.b32.xlu0 %v1048, 32
    %v1051 = vpop.permute.xlu0 %1050
    %1053 = vst.msk [vmem:[%s405] sm:$0xff] %vm132, %v1051
    %s1054 = scalar_lea.vmem [#allocation2], 32
    %v1055 = vld [vmem:[%s1054] sm:$0xff]
    %v1056 = vsel %vm132, %v1051, 0
    %1058 = vmatpush.msra.mxu0 0.0
    %1059 = vmatpush.msra.mxu0 0.0
    %1060 = vmatpush.msra.mxu0 0.0
    %1061 = vmatpush.msra.mxu0 0.0
    %1062 = vmatpush.msra.mxu0 0.0
    %1063 = vmatpush.msra.mxu0 0.0
    %1064 = vmatpush.msra.mxu0 0.0
    %1065 = vmatpush.msra.mxu0 0.0
    %1066 = vmatpush.msra.mxu0 0.0
    %1067 = vmatpush.msra.mxu0 0.0
    %1068 = vmatpush.msra.mxu0 0.0
    %1069 = vmatpush.msra.mxu0 0.0
    %1070 = vmatpush.msra.mxu0 %v781
    %1071 = vmatpush.msra.mxu0 %v780
    %1072 = vmatpush.msra.mxu0 %v779
    %1073 = vmatpush.msra.mxu0 %v778
    %1074 = vmatmul.f32.gmra.mxu0 %v1056
    %v1075 = vpop.f32.mrf.mxu0
    %v1076 = vadd.f32 0.0, %v1075
    %1077 = vdwg.mxu0
    %v1078 = vadd.f32 %v1055, %v1076
    %v1079 = vxor.u32 %v1078, 2147483648
    %v1080 = vmul.f32 %v1079, 1.442695
    %v1081 = vpow.pop %v1080
    %v1082 = vadd.f32 %v1081, 1.0
    %v1083 = vrcp.pop %v1082
    %v1084 = vmul.f32 %v1082, %v1083
    %v1085 = vsub.f32 1.0, %v1084
    %v1086 = vmul.f32 %v1083, %v1085
    %v1087 = vadd.f32 %v1083, %v1086
    %vm1088 = vweird.f32 %v1082
    %vm1089 = vweird.f32 %v1083
    %vm1090 = vmor %vm1088, %vm1089
    %v1091 = vsel %vm1090, %v1083, %v1087
    %v1092 = vand.u32 2147483647, %v1082
    %vm1093 = vcmp.eq.f32.partialorder %v1092, 8.507059e+37
    %v1094 = vand.u32 %v1082, 2147483648
    %v1095 = vor.u32 1.1754944e-38, %v1094
    %v1096 = vsel %vm1093, %v1095, %v1091
    %v1097 = vmul.f32 1.0, %v1096
    %v1098 = vtanh.pop %v1078
    %v1099 = vmul.f32 %v1097, %v1042
    %1101 = vrot.lane.b32.xlu0 %v1098, 64
    %v1102 = vpop.permute.xlu0 %1101
    %v1104 = vmul.f32 %v1097, %v1102
    %1106 = vrot.lane.b32.xlu0 %v1104, 32
    %v1107 = vpop.permute.xlu0 %1106
    %v1109 = vadd.f32 %v1099, %v1107
    %v1110 = vtanh.pop %v1109
    %1112 = vrot.lane.b32.xlu0 %v1110, 64
    %v1113 = vpop.permute.xlu0 %1112
    %v1115 = vmul.f32 %v1097, %v1113
    %1117 = vrot.lane.b32.xlu0 %v1115, 32
    %v1118 = vpop.permute.xlu0 %1117
    %1120 = vst.msk [vmem:[%s473] sm:$0xff] %vm132, %v1118
    %s1121 = scalar_lea.vmem [#allocation2], 40
    %v1122 = vld [vmem:[%s1121] sm:$0xff]
    %v1123 = vsel %vm132, %v1118, 0
    %1125 = vmatpush.msra.mxu0 0.0
    %1126 = vmatpush.msra.mxu0 0.0
    %1127 = vmatpush.msra.mxu0 0.0
    %1128 = vmatpush.msra.mxu0 0.0
    %1129 = vmatpush.msra.mxu0 0.0
    %1130 = vmatpush.msra.mxu0 0.0
    %1131 = vmatpush.msra.mxu0 0.0
    %1132 = vmatpush.msra.mxu0 0.0
    %1133 = vmatpush.msra.mxu0 0.0
    %1134 = vmatpush.msra.mxu0 0.0
    %1135 = vmatpush.msra.mxu0 0.0
    %1136 = vmatpush.msra.mxu0 0.0
    %1137 = vmatpush.msra.mxu0 %v781
    %1138 = vmatpush.msra.mxu0 %v780
    %1139 = vmatpush.msra.mxu0 %v779
    %1140 = vmatpush.msra.mxu0 %v778
    %1141 = vmatmul.f32.gmra.mxu0 %v1123
    %v1142 = vpop.f32.mrf.mxu0
    %v1143 = vadd.f32 0.0, %v1142
    %1144 = vdwg.mxu0
    %v1145 = vadd.f32 %v1122, %v1143
    %v1146 = vxor.u32 %v1145, 2147483648
    %v1147 = vmul.f32 %v1146, 1.442695
    %v1148 = vpow.pop %v1147
    %v1149 = vadd.f32 %v1148, 1.0
    %v1150 = vrcp.pop %v1149
    %v1151 = vmul.f32 %v1149, %v1150
    %v1152 = vsub.f32 1.0, %v1151
    %v1153 = vmul.f32 %v1150, %v1152
    %v1154 = vadd.f32 %v1150, %v1153
    %vm1155 = vweird.f32 %v1149
    %vm1156 = vweird.f32 %v1150
    %vm1157 = vmor %vm1155, %vm1156
    %v1158 = vsel %vm1157, %v1150, %v1154
    %v1159 = vand.u32 2147483647, %v1149
    %vm1160 = vcmp.eq.f32.partialorder %v1159, 8.507059e+37
    %v1161 = vand.u32 %v1149, 2147483648
    %v1162 = vor.u32 1.1754944e-38, %v1161
    %v1163 = vsel %vm1160, %v1162, %v1158
    %v1164 = vmul.f32 1.0, %v1163
    %v1165 = vtanh.pop %v1145
    %v1166 = vmul.f32 %v1164, %v1109
    %1168 = vrot.lane.b32.xlu0 %v1165, 64
    %v1169 = vpop.permute.xlu0 %1168
    %v1171 = vmul.f32 %v1164, %v1169
    %1173 = vrot.lane.b32.xlu0 %v1171, 32
    %v1174 = vpop.permute.xlu0 %1173
    %v1176 = vadd.f32 %v1166, %v1174
    %v1177 = vtanh.pop %v1176
    %1179 = vrot.lane.b32.xlu0 %v1177, 64
    %v1180 = vpop.permute.xlu0 %1179
    %v1182 = vmul.f32 %v1164, %v1180
    %1184 = vrot.lane.b32.xlu0 %v1182, 32
    %v1185 = vpop.permute.xlu0 %1184
    %1187 = vst.msk [vmem:[%s541] sm:$0xff] %vm132, %v1185
    %s1188 = scalar_lea.vmem [#allocation2], 48
    %v1189 = vld [vmem:[%s1188] sm:$0xff]
    %v1190 = vsel %vm132, %v1185, 0
    %1192 = vmatpush.msra.mxu0 0.0
    %1193 = vmatpush.msra.mxu0 0.0
    %1194 = vmatpush.msra.mxu0 0.0
    %1195 = vmatpush.msra.mxu0 0.0
    %1196 = vmatpush.msra.mxu0 0.0
    %1197 = vmatpush.msra.mxu0 0.0
    %1198 = vmatpush.msra.mxu0 0.0
    %1199 = vmatpush.msra.mxu0 0.0
    %1200 = vmatpush.msra.mxu0 0.0
    %1201 = vmatpush.msra.mxu0 0.0
    %1202 = vmatpush.msra.mxu0 0.0
    %1203 = vmatpush.msra.mxu0 0.0
    %1204 = vmatpush.msra.mxu0 %v781
    %1205 = vmatpush.msra.mxu0 %v780
    %1206 = vmatpush.msra.mxu0 %v779
    %1207 = vmatpush.msra.mxu0 %v778
    %1208 = vmatmul.f32.gmra.mxu0 %v1190
    %v1209 = vpop.f32.mrf.mxu0
    %v1210 = vadd.f32 0.0, %v1209
    %1211 = vdwg.mxu0
    %v1212 = vadd.f32 %v1189, %v1210
    %v1213 = vxor.u32 %v1212, 2147483648
    %v1214 = vmul.f32 %v1213, 1.442695
    %v1215 = vpow.pop %v1214
    %v1216 = vadd.f32 %v1215, 1.0
    %v1217 = vrcp.pop %v1216
    %v1218 = vmul.f32 %v1216, %v1217
    %v1219 = vsub.f32 1.0, %v1218
    %v1220 = vmul.f32 %v1217, %v1219
    %v1221 = vadd.f32 %v1217, %v1220
    %vm1222 = vweird.f32 %v1216
    %vm1223 = vweird.f32 %v1217
    %vm1224 = vmor %vm1222, %vm1223
    %v1225 = vsel %vm1224, %v1217, %v1221
    %v1226 = vand.u32 2147483647, %v1216
    %vm1227 = vcmp.eq.f32.partialorder %v1226, 8.507059e+37
    %v1228 = vand.u32 %v1216, 2147483648
    %v1229 = vor.u32 1.1754944e-38, %v1228
    %v1230 = vsel %vm1227, %v1229, %v1225
    %v1231 = vmul.f32 1.0, %v1230
    %v1232 = vtanh.pop %v1212
    %v1233 = vmul.f32 %v1231, %v1176
    %1235 = vrot.lane.b32.xlu0 %v1232, 64
    %v1236 = vpop.permute.xlu0 %1235
    %v1238 = vmul.f32 %v1231, %v1236
    %1240 = vrot.lane.b32.xlu0 %v1238, 32
    %v1241 = vpop.permute.xlu0 %1240
    %v1243 = vadd.f32 %v1233, %v1241
    %v1244 = vtanh.pop %v1243
    %1246 = vrot.lane.b32.xlu0 %v1244, 64
    %v1247 = vpop.permute.xlu0 %1246
    %v1249 = vmul.f32 %v1231, %v1247
    %1251 = vrot.lane.b32.xlu0 %v1249, 32
    %v1252 = vpop.permute.xlu0 %1251
    %1254 = vst.msk [vmem:[%s609] sm:$0xff] %vm132, %v1252
    %s1255 = scalar_lea.vmem [#allocation2], 56
    %v1256 = vld [vmem:[%s1255] sm:$0xff]
    %v1257 = vsel %vm132, %v1252, 0
    %1259 = vmatpush.msra.mxu0 0.0
    %1260 = vmatpush.msra.mxu0 0.0
    %1261 = vmatpush.msra.mxu0 0.0
    %1262 = vmatpush.msra.mxu0 0.0
    %1263 = vmatpush.msra.mxu0 0.0
    %1264 = vmatpush.msra.mxu0 0.0
    %1265 = vmatpush.msra.mxu0 0.0
    %1266 = vmatpush.msra.mxu0 0.0
    %1267 = vmatpush.msra.mxu0 0.0
    %1268 = vmatpush.msra.mxu0 0.0
    %1269 = vmatpush.msra.mxu0 0.0
    %1270 = vmatpush.msra.mxu0 0.0
    %1271 = vmatpush.msra.mxu0 %v781
    %1272 = vmatpush.msra.mxu0 %v780
    %1273 = vmatpush.msra.mxu0 %v779
    %1274 = vmatpush.msra.mxu0 %v778
    %1275 = vmatmul.f32.gmra.mxu0 %v1257
    %v1276 = vpop.f32.mrf.mxu0
    %v1277 = vadd.f32 0.0, %v1276
    %1278 = vdwg.mxu0
    %v1279 = vadd.f32 %v1256, %v1277
    %v1280 = vxor.u32 %v1279, 2147483648
    %v1281 = vmul.f32 %v1280, 1.442695
    %v1282 = vpow.pop %v1281
    %v1283 = vadd.f32 %v1282, 1.0
    %v1284 = vrcp.pop %v1283
    %v1285 = vmul.f32 %v1283, %v1284
    %v1286 = vsub.f32 1.0, %v1285
    %v1287 = vmul.f32 %v1284, %v1286
    %v1288 = vadd.f32 %v1284, %v1287
    %vm1289 = vweird.f32 %v1283
    %vm1290 = vweird.f32 %v1284
    %vm1291 = vmor %vm1289, %vm1290
    %v1292 = vsel %vm1291, %v1284, %v1288
    %v1293 = vand.u32 2147483647, %v1283
    %vm1294 = vcmp.eq.f32.partialorder %v1293, 8.507059e+37
    %v1295 = vand.u32 %v1283, 2147483648
    %v1296 = vor.u32 1.1754944e-38, %v1295
    %v1297 = vsel %vm1294, %v1296, %v1292
    %v1298 = vmul.f32 1.0, %v1297
    %v1299 = vtanh.pop %v1279
    %v1300 = vmul.f32 %v1298, %v1243
    %1302 = vrot.lane.b32.xlu0 %v1299, 64
    %v1303 = vpop.permute.xlu0 %1302
    %v1305 = vmul.f32 %v1298, %v1303
    %1307 = vrot.lane.b32.xlu0 %v1305, 32
    %v1308 = vpop.permute.xlu0 %1307
    %v1310 = vadd.f32 %v1300, %v1308
    %v1311 = vtanh.pop %v1310
    %1313 = vrot.lane.b32.xlu0 %v1311, 64
    %v1314 = vpop.permute.xlu0 %1313
    %v1316 = vmul.f32 %v1298, %v1314
    %1318 = vrot.lane.b32.xlu0 %v1316, 32
    %v1319 = vpop.permute.xlu0 %1318
    %1321 = vst.msk [vmem:[%s677] sm:$0xff] %vm132, %v1319
    %s1322 = scalar_lea.vmem [#allocation14], 8
    %1323 = vst.msk [vmem:[%s1322] sm:$0xff] %vm132, %v1319
    %1325 = vrot.lane.b32.xlu0 %v1310, 96
    %v1326 = vpop.permute.xlu0 %1325
    %s1328 = scalar_lea.vmem [#allocation15], 8
    %1329 = vst.msk [vmem:[%s1328] sm:$0xff] %vm132, %v1326
    // Predicated region
    $region54: #{tpu_custom_call.1} parent=1 // pred_check
      _
    $region55: #{tpu_custom_call.1} parent=1 // pred_check_branch
      %1331 = sbr.rel (0) target = $region57
    $region56: #{tpu_custom_call.1} parent=1 // pred_region
      _
    $region57: #{tpu_custom_call.1} parent=1 // pred_fallthru
      _
    // Predicated region
    $region58: #{tpu_custom_call.1} parent=1 // pred_check
      _
    $region59: #{tpu_custom_call.1} parent=1 // pred_check_branch
      %1333 = sbr.rel (0) target = $region61
    $region60: #{tpu_custom_call.1} parent=1 // pred_region
      %1335 = vsyncadd [#allocation5], 0
      %s1336 = sshll.u32 [#allocation14], 4
      %s1337 = int_to_ptr.vmem [resolvable:$true] %s1336
      %s1338 = sshll.u32 %s8, 4
      %s1339 = int_to_ptr.hbm [resolvable:$true] %s1338
      %1344 = dma.vmem_to_hbm [thread:$0]  %s1337, 256, %s1339, [#allocation5], 128, 128, 8
    $region61: #{tpu_custom_call.1} parent=1 // pred_fallthru
      _
    // Predicated region
    $region62: #{tpu_custom_call.1} parent=1 // pred_check
      _
    $region63: #{tpu_custom_call.1} parent=1 // pred_check_branch
      %1346 = sbr.rel (0) target = $region65
    $region64: #{tpu_custom_call.1} parent=1 // pred_region
      %1348 = vsyncadd [#allocation16], 0
      %s1349 = sshll.u32 [#allocation15], 4
      %s1350 = int_to_ptr.vmem [resolvable:$true] %s1349
      %s1351 = sshll.u32 %s9, 4
      %s1352 = int_to_ptr.hbm [resolvable:$true] %s1351
      %1357 = dma.vmem_to_hbm [thread:$0]  %s1350, 256, %s1352, [#allocation16], 128, 128, 8
    $region65: #{tpu_custom_call.1} parent=1 // pred_fallthru
      _
    // Predicated region
    $region66: #{tpu_custom_call.1} parent=1 // pred_check
      _
    $region67: #{tpu_custom_call.1} parent=1 // pred_check_branch
      %1359 = sbr.rel (0) target = $region69
    $region68: #{tpu_custom_call.1} parent=1 // pred_region
      _
    $region69: #{tpu_custom_call.1} parent=1 // pred_fallthru
      _
    // Predicated region
    $region70: #{tpu_custom_call.1} parent=1 // pred_check
      _
    $region71: #{tpu_custom_call.1} parent=1 // pred_check_branch
      %1361 = sbr.rel (0) target = $region73
    $region72: #{tpu_custom_call.1} parent=1 // pred_region
      %1363 = dma.done [#allocation5], 256
    $region73: #{tpu_custom_call.1} parent=1 // pred_fallthru
      _
    // Predicated region
    $region74: #{tpu_custom_call.1} parent=1 // pred_check
      _
    $region75: #{tpu_custom_call.1} parent=1 // pred_check_branch
      %1365 = sbr.rel (0) target = $region77
    $region76: #{tpu_custom_call.1} parent=1 // pred_region
      %1367 = dma.done [#allocation16], 256
    $region77: #{tpu_custom_call.1} parent=1 // pred_fallthru
      _
    %1368 = vsyncpa [#allocation4], 1
    %1369 = vsyncpa [#allocation7], 1
    %1370 = vsyncpa [#allocation10], 1
    %1371 = vsyncpa [#allocation13], 1
    %1372 = vsyncpa [#allocation5], 1
    %1373 = vsyncpa [#allocation16], 1

</llo_original>
